<compile_context>
chip_gen: v6e
topology: v6e:2x2x1
jax: 0.10.0
libtpu: 0.0.40
codegen_flags: <defaults>
</compile_context>

<pallas_src>
import numpy as np
import jax
import jax.numpy as jnp
from jax import lax
from jax.experimental import pallas as pl
from jax.experimental.pallas import tpu as pltpu

KSIZE = 3   # kernel_size
PAD = 1     # padding ("same" conv)


# ----------------------------------------------------------------------------
# projector_t : adjoint linear operator applied to the flattened dual variable.
# ----------------------------------------------------------------------------
def projector_t(h, options, img_hw, block_n=512, block_k=512):
    """t = h_flat @ options, tiled over output columns and the contraction.

    TODO(synk): the real projector_t is an external CT back-projection (adjoint
    Radon transform); here `options` is taken to be the dense system matrix
    (sino_pixels x image_pixels) and the adjoint is a dense matmul.
    TODO(synk): for production, stream `options` as bf16 (f32 accumulate) to
    halve HBM traffic; kept f32 here so the numerical self-check stays tight.
    """
    N = h.shape[0]
    M = int(np.prod(h.shape[1:]))
    H, W = img_hw
    P = H * W
    bn = min(block_n, P)
    bk = min(block_k, M)
    assert P % bn == 0 and M % bk == 0, "toy sizes must tile evenly"

    h2 = h.reshape(N, M).astype(jnp.float32)

    def kernel(h_ref, a_ref, t_ref, acc_ref):
        @pl.when(pl.program_id(1) == 0)
        def _():
            acc_ref[...] = jnp.zeros_like(acc_ref)

        acc_ref[...] += jnp.dot(h_ref[...], a_ref[...],
                                preferred_element_type=jnp.float32)

        @pl.when(pl.program_id(1) == pl.num_programs(1) - 1)
        def _():
            t_ref[...] = acc_ref[...]

    t = pl.pallas_call(
        kernel,
        out_shape=jax.ShapeDtypeStruct((N, P), jnp.float32),
        grid=(P // bn, M // bk),
        in_specs=[pl.BlockSpec((N, bk), lambda j, k: (0, k)),
                  pl.BlockSpec((bk, bn), lambda j, k: (k, j))],
        out_specs=pl.BlockSpec((N, bn), lambda j, k: (0, j)),
        scratch_shapes=[pltpu.VMEM((N, bn), jnp.float32)],
        compiler_params=pltpu.CompilerParams(
            dimension_semantics=("parallel", "arbitrary")),
    )(h2, options)
    return t.reshape(N, 1, H, W)


# ----------------------------------------------------------------------------
# Fused 3-layer CNN + residual, one grid step per batch element.
# ----------------------------------------------------------------------------
def _conv_weight_as_matrix(w_hwio):
    """(3, 3, Cin, Cout) -> (Cout, 9*Cin), tap-major / channel-minor."""
    cout = w_hwio.shape[3]
    return jnp.transpose(w_hwio, (3, 0, 1, 2)).reshape(cout, -1)


def primal_cnn(x_wide, t_wide, params, H, W):
    """x_wide / t_wide are in "wide row" layout: (N, C, H*Wp), Wp = W + 2, with
    image pixel (y, x) at flat index y*Wp + x and zeros at x in {W, W+1}.
    The output uses the same layout."""
    N, Cp, L = x_wide.shape
    Wp = W + 2 * PAD
    assert L == H * Wp
    Cin = Cp + 1
    Ch = params["w2"].shape[2]
    Cmax = max(Cin, Ch)
    # flattened padded image has (H+2)*Wp entries; +2 tail keeps every tap slice
    # (lane offsets 0 .. 2*Wp+2) in range.
    LPA = (H + 2) * Wp + 2

    w1m = _conv_weight_as_matrix(params["w1"])   # (Ch, 9*Cin)
    w2m = _conv_weight_as_matrix(params["w2"])   # (Ch, 9*Ch)
    w3m = _conv_weight_as_matrix(params["w3"])   # (Cp, 9*Ch)
    b1 = params["b1"].reshape(Ch, 1).astype(jnp.float32)
    b2 = params["b2"].reshape(Ch, 1).astype(jnp.float32)
    b3 = params["b3"].reshape(Cp, 1).astype(jnp.float32)
    alphas = jnp.stack([params["a1"].reshape(()),
                        params["a2"].reshape(())]).astype(jnp.float32)

    # lane offsets of the 9 taps into the flattened padded image
    offs = tuple(dy * Wp + dx for dy in range(KSIZE) for dx in range(KSIZE))

    def kernel(x_ref, t_ref, w1_ref, b1_ref, w2_ref, b2_ref, w3_ref, b3_ref,
               al_ref, out_ref, pin_ref):
        # Re-zero ONLY the 1-px border strips of the shared padded scratch; the
        # interior [Wp+1, Wp+1+L) is fully overwritten below.  (2*(Wp+1) lanes
        # instead of two full Hp*Wp sweeps, and each grid step stays
        # self-contained so the batch axis can run "parallel" on both v7x cores.)
        pin_ref[:, 0:Wp + 1] = jnp.zeros((Cmax, Wp + 1), jnp.float32)
        pin_ref[:, Wp + 1 + L:LPA] = jnp.zeros((Cmax, LPA - (Wp + 1 + L)),
                                               jnp.float32)

        # mask for the 2 wrap-around ("garbage") lanes at the end of each wide row
        col = lax.broadcasted_iota(jnp.int32, (1, L), 1) % Wp
        interior = col < W

        def conv(w_ref, b_ref, cin):
            # one K = 9*cin MXU matmul: (Cout, 9*cin) @ (9*cin, L)
            rhs = jnp.concatenate(
                [pin_ref[0:cin, off:off + L] for off in offs], axis=0)
            return jnp.dot(w_ref[...], rhs,
                           preferred_element_type=jnp.float32) + b_ref[...]

        # ---- layer 1: concat(x, t) fused into the padded scratch -------------
        pin_ref[0:Cp, Wp + 1:Wp + 1 + L] = x_ref[0]
        pin_ref[Cp:Cin, Wp + 1:Wp + 1 + L] = t_ref[0]
        z = conv(w1_ref, b1_ref, Cin)
        z = jnp.where(z > 0, z, al_ref[0] * z)               # PReLU
        pin_ref[0:Ch, Wp + 1:Wp + 1 + L] = jnp.where(interior, z, 0.0)

        # ---- layer 2 (reuses the same padded scratch) -------------------------
        z = conv(w2_ref, b2_ref, Ch)
        z = jnp.where(z > 0, z, al_ref[1] * z)
        pin_ref[0:Ch, Wp + 1:Wp + 1 + L] = jnp.where(interior, z, 0.0)

        # ---- layer 3 + residual -----------------------------------------------
        z = conv(w3_ref, b3_ref, Ch)
        out_ref[0] = x_ref[0] + z

    full = lambda a: pl.BlockSpec(a.shape, lambda n: (0,) * a.ndim)

    # TODO(synk): for realistic CT image sizes, add a row-tile grid axis (block
    # of H rows + 1-row halo) so the scratch stays within VMEM on v7x (64 MiB).
    return pl.pallas_call(
        kernel,
        out_shape=jax.ShapeDtypeStruct((N, Cp, L), jnp.float32),
        grid=(N,),
        in_specs=[
            pl.BlockSpec((1, Cp, L), lambda n: (n, 0, 0)),      # x  (wide rows)
            pl.BlockSpec((1, 1, L), lambda n: (n, 0, 0)),       # t  (wide rows)
            full(w1m), full(b1),
            full(w2m), full(b2),
            full(w3m), full(b3),
            pl.BlockSpec(memory_space=pltpu.MemorySpace.SMEM),  # PReLU slopes
        ],
        out_specs=pl.BlockSpec((1, Cp, L), lambda n: (n, 0, 0)),
        scratch_shapes=[pltpu.VMEM((Cmax, LPA), jnp.float32)],
        compiler_params=pltpu.CompilerParams(
            dimension_semantics=("parallel",)),
    )(x_wide, t_wide, w1m, b1, w2m, b2, w3m, b3, alphas)


# ----------------------------------------------------------------------------
# Full forward (glue in plain JAX)
# ----------------------------------------------------------------------------
def primal_module_forward(x, h, options, params):
    N, Cp, H, W = x.shape
    Wp = W + 2 * PAD

    t = projector_t(h, options, (H, W))                        # (N, 1, H, W)

    # "wide row" layout: append 2 zero lanes per image row and flatten H*Wp.
    # This is the only host-side data movement: no NCHW<->NHWC transposes and no
    # full 2-D padded tensor in HBM (the H padding lives in the kernel scratch).
    def widen(z):
        zp = jnp.pad(z, ((0, 0), (0, 0), (0, 0), (0, 2 * PAD)))
        return zp.reshape(z.shape[0], z.shape[1], H * Wp)

    out_wide = primal_cnn(widen(x), widen(t), params, H, W)    # (N, Cp, H*Wp)
    return out_wide.reshape(N, Cp, H, Wp)[..., :W]             # already NCHW


# ----------------------------------------------------------------------------
# Pure-JAX reference (for numerical check)
# ----------------------------------------------------------------------------
def reference_forward(x, h, options, params):
    N, Cp, H, W = x.shape
    t = (h.reshape(N, -1) @ options).reshape(N, 1, H, W)
    z = jnp.concatenate([x, t], axis=1)

    def conv(z, w_hwio, b):
        w_oihw = jnp.transpose(w_hwio, (3, 2, 0, 1))
        y = lax.conv_general_dilated(z, w_oihw, (1, 1),
                                     ((PAD, PAD), (PAD, PAD)),
                                     dimension_numbers=("NCHW", "OIHW", "NCHW"))
        return y + b.reshape(1, -1, 1, 1)

    def prelu(z, a):
        return jnp.where(z > 0, z, a.reshape(()) * z)

    y = prelu(conv(z, params["w1"], params["b1"]), params["a1"])
    y = prelu(conv(y, params["w2"], params["b2"]), params["a2"])
    y = conv(y, params["w3"], params["b3"])
    return x + y


def init_params(key, n_primal, hid_channels):
    cin = n_primal + 1
    ks = jax.random.split(key, 6)
    s = 0.1
    return {
        "w1": s * jax.random.normal(ks[0], (KSIZE, KSIZE, cin, hid_channels), jnp.float32),
        "b1": s * jax.random.normal(ks[1], (hid_channels,), jnp.float32),
        "a1": jnp.full((1,), 0.25, jnp.float32),   # nn.PReLU() default init
        "w2": s * jax.random.normal(ks[2], (KSIZE, KSIZE, hid_channels, hid_channels), jnp.float32),
        "b2": s * jax.random.normal(ks[3], (hid_channels,), jnp.float32),
        "a2": jnp.full((1,), 0.25, jnp.float32),
        "w3": s * jax.random.normal(ks[4], (KSIZE, KSIZE, hid_channels, n_primal), jnp.float32),
        "b3": s * jax.random.normal(ks[5], (n_primal,), jnp.float32),
    }


if __name__ == "__main__":
    N, n_primal, hid_channels = 2, 4, 32
    H = W = 16
    n_angles = n_det = 16               # dual/sinogram domain (single dual channel)

    key = jax.random.PRNGKey(0)
    kx, kh, ko, kp = jax.random.split(key, 4)

    x = jax.random.normal(kx, (N, n_primal, H, W), jnp.float32)
    h = jax.random.normal(kh, (N, 1, n_angles, n_det), jnp.float32)
    # "options": stand-in dense system matrix for the projector adjoint
    options = jax.random.normal(ko, (n_angles * n_det, H * W), jnp.float32) / jnp.sqrt(
        float(n_angles * n_det))
    params = init_params(kp, n_primal, hid_channels)

    fwd = jax.jit(primal_module_forward)
    out = jax.block_until_ready(fwd(x, h, options, params))

    ref = reference_forward(x, h, options, params)
    err = float(jnp.max(jnp.abs(out - ref)))
    # kernel uses default-precision (single-pass bf16) MXU matmuls per the perf
    # guidance, while the XLA reference may run at higher precision -> allow ~1%.
    if not np.allclose(np.asarray(out), np.asarray(ref), atol=1e-2, rtol=1e-2):
        raise AssertionError(f"Pallas kernel mismatch vs reference, max abs err = {err}")

    print("KERNEL_OK")
</pallas_src>

<mosaic_0001>
module attributes {stable_mosaic.version = 11 : i64} {
  func.func @kernel(%arg0: i32, %arg1: i32, %arg2: memref<2x256xf32, #tpu.memory_space<vmem>>, %arg3: memref<256x256xf32, #tpu.memory_space<vmem>>, %arg4: memref<2x256xf32, #tpu.memory_space<vmem>>, %arg5: memref<2x256xf32, #tpu.memory_space<vmem>>) attributes {dimension_semantics = [#tpu.dimension_semantics<parallel>, #tpu.dimension_semantics<arbitrary>], iteration_bounds = array<i64: 1, 1>, scalar_prefetch = 0 : i64, scratch_operands = 1 : i64, tpu.core_type = #tpu.core_type<tc>, window_params = [{transform_indices = @transform_0, window_bounds = array<i64: 2, 256>}, {transform_indices = @transform_1, window_bounds = array<i64: 256, 256>}, {transform_indices = @transform_2, window_bounds = array<i64: 2, 256>}]} {
    %c0_i32 = arith.constant 0 : i32
    %0 = arith.cmpi eq, %arg1, %c0_i32 : i32
    %1 = arith.extui %0 : i1 to i32
    %c0_i32_0 = arith.constant 0 : i32
    %2 = arith.cmpi ne, %1, %c0_i32_0 : i32
    scf.if %2 {
      %cst_10 = arith.constant 0.000000e+00 : f32
      %12 = vector.broadcast %cst_10 : f32 to vector<2x256xf32>
      %c0_11 = arith.constant 0 : index
      %c0_12 = arith.constant 0 : index
      %13 = vector.load %arg5[%c0_11, %c0_12] : memref<2x256xf32, #tpu.memory_space<vmem>>, vector<2x256xf32>
      tpu.vector_store %arg5[%c0_11, %c0_12], %12 {strides = array<i32>} : memref<2x256xf32, #tpu.memory_space<vmem>>, vector<2x256xf32>,
    } else {
    }
    %c0 = arith.constant 0 : index
    %c0_1 = arith.constant 0 : index
    %3 = vector.load %arg5[%c0, %c0_1] : memref<2x256xf32, #tpu.memory_space<vmem>>, vector<2x256xf32>
    %c0_2 = arith.constant 0 : index
    %c0_3 = arith.constant 0 : index
    %4 = vector.load %arg2[%c0_2, %c0_3] : memref<2x256xf32, #tpu.memory_space<vmem>>, vector<2x256xf32>
    %c0_4 = arith.constant 0 : index
    %c0_5 = arith.constant 0 : index
    %5 = vector.load %arg3[%c0_4, %c0_5] : memref<256x256xf32, #tpu.memory_space<vmem>>, vector<256x256xf32>
    %cst = arith.constant dense<0.000000e+00> : vector<2x256xf32>
    %6 = tpu.matmul %4, %5, %cst {dimension_numbers = #tpu.dot_dimension_numbers<[1], [0], [0], [1], [0, 0, 1, 1], [], []>} : vector<2x256xf32>, vector<256x256xf32>, vector<2x256xf32> -> vector<2x256xf32>
    %7 = arith.addf %3, %6 : vector<2x256xf32>
    %c0_6 = arith.constant 0 : index
    %c0_7 = arith.constant 0 : index
    %8 = vector.load %arg5[%c0_6, %c0_7] : memref<2x256xf32, #tpu.memory_space<vmem>>, vector<2x256xf32>
    tpu.vector_store %arg5[%c0_6, %c0_7], %7 {strides = array<i32>} : memref<2x256xf32, #tpu.memory_space<vmem>>, vector<2x256xf32>,
    %c0_i32_8 = arith.constant 0 : i32
    %9 = arith.cmpi eq, %arg1, %c0_i32_8 : i32
    %10 = arith.extui %9 : i1 to i32
    %c0_i32_9 = arith.constant 0 : i32
    %11 = arith.cmpi ne, %10, %c0_i32_9 : i32
    scf.if %11 {
      %c0_10 = arith.constant 0 : index
      %c0_11 = arith.constant 0 : index
      %12 = vector.load %arg5[%c0_10, %c0_11] : memref<2x256xf32, #tpu.memory_space<vmem>>, vector<2x256xf32>
      %c0_12 = arith.constant 0 : index
      %c0_13 = arith.constant 0 : index
      %13 = vector.load %arg4[%c0_12, %c0_13] : memref<2x256xf32, #tpu.memory_space<vmem>>, vector<2x256xf32>
      tpu.vector_store %arg4[%c0_12, %c0_13], %12 {strides = array<i32>} : memref<2x256xf32, #tpu.memory_space<vmem>>, vector<2x256xf32>,
    } else {
    }
    return
  }
  func.func @transform_0(%arg0: i32, %arg1: i32) -> (i32, i32) {
    %c0_i32 = arith.constant 0 : i32
    %c0_i32_0 = arith.constant 0 : i32
    return %c0_i32, %arg1 : i32, i32
  }
  func.func @transform_1(%arg0: i32, %arg1: i32) -> (i32, i32) {
    %c0_i32 = arith.constant 0 : i32
    return %arg1, %arg0 : i32, i32
  }
  func.func @transform_2(%arg0: i32, %arg1: i32) -> (i32, i32) {
    %c0_i32 = arith.constant 0 : i32
    %c0_i32_0 = arith.constant 0 : i32
    return %c0_i32, %arg0 : i32, i32
  }
}

module attributes {stable_mosaic.version = 11 : i64} {
  func.func @kernel(%arg0: i32, %arg1: memref<1x4x288xf32, #tpu.memory_space<vmem>>, %arg2: memref<1x1x288xf32, #tpu.memory_space<vmem>>, %arg3: memref<32x45xf32, #tpu.memory_space<vmem>>, %arg4: memref<32x1xf32, #tpu.memory_space<vmem>>, %arg5: memref<32x288xf32, #tpu.memory_space<vmem>>, %arg6: memref<32x1xf32, #tpu.memory_space<vmem>>, %arg7: memref<4x288xf32, #tpu.memory_space<vmem>>, %arg8: memref<4x1xf32, #tpu.memory_space<vmem>>, %arg9: memref<2xf32, #tpu.memory_space<smem>>, %arg10: memref<1x4x288xf32, #tpu.memory_space<vmem>>, %arg11: memref<32x326xf32, #tpu.memory_space<vmem>>) attributes {dimension_semantics = [#tpu.dimension_semantics<parallel>], iteration_bounds = array<i64: 2>, scalar_prefetch = 0 : i64, scratch_operands = 1 : i64, tpu.core_type = #tpu.core_type<tc>, window_params = [{transform_indices = @transform_0, window_bounds = array<i64: 1, 4, 288>}, {transform_indices = @transform_1, window_bounds = array<i64: 1, 1, 288>}, {pipeline_mode = #tpu.pipeline_mode<synchronous>, transform_indices = @transform_2, window_bounds = array<i64: 32, 45>}, {pipeline_mode = #tpu.pipeline_mode<synchronous>, transform_indices = @transform_3, window_bounds = array<i64: 32, 1>}, {pipeline_mode = #tpu.pipeline_mode<synchronous>, transform_indices = @transform_4, window_bounds = array<i64: 32, 288>}, {pipeline_mode = #tpu.pipeline_mode<synchronous>, transform_indices = @transform_5, window_bounds = array<i64: 32, 1>}, {pipeline_mode = #tpu.pipeline_mode<synchronous>, transform_indices = @transform_6, window_bounds = array<i64: 4, 288>}, {pipeline_mode = #tpu.pipeline_mode<synchronous>, transform_indices = @transform_7, window_bounds = array<i64: 4, 1>}, {transform_indices = @transform_8, window_bounds = array<i64: 2>}, {transform_indices = @transform_9, window_bounds = array<i64: 1, 4, 288>}]} {
    %cst = arith.constant 0.000000e+00 : f32
    %0 = vector.broadcast %cst : f32 to vector<32x19xf32>
    %c0 = arith.constant 0 : index
    %c0_0 = arith.constant 0 : index
    %1 = vector.load %arg11[%c0, %c0_0] : memref<32x326xf32, #tpu.memory_space<vmem>>, vector<32x19xf32>
    tpu.vector_store %arg11[%c0, %c0_0], %0 {strides = array<i32>} : memref<32x326xf32, #tpu.memory_space<vmem>>, vector<32x19xf32>,
    %cst_1 = arith.constant 0.000000e+00 : f32
    %2 = vector.broadcast %cst_1 : f32 to vector<32x19xf32>
    %c0_2 = arith.constant 0 : index
    %c307 = arith.constant 307 : index
    %3 = vector.load %arg11[%c0_2, %c307] : memref<32x326xf32, #tpu.memory_space<vmem>>, vector<32x19xf32>
    tpu.vector_store %arg11[%c0_2, %c307], %2 {strides = array<i32>} : memref<32x326xf32, #tpu.memory_space<vmem>>, vector<32x19xf32>,
    %4 = tpu.iota {dimensions = array<i32: 1>} : vector<1x288xi32>
    %c18_i32 = arith.constant 18 : i32
    %c0_i32 = arith.constant 0 : i32
    %5 = arith.cmpi eq, %c18_i32, %c0_i32 : i32
    %c1_i32 = arith.constant 1 : i32
    %6 = arith.select %5, %c1_i32, %c18_i32 : i32
    %7 = vector.broadcast %6 : i32 to vector<1x288xi32>
    %8 = arith.remsi %4, %7 : vector<1x288xi32>
    %c0_i32_3 = arith.constant 0 : i32
    %9 = vector.broadcast %c0_i32_3 : i32 to vector<1x288xi32>
    %10 = arith.cmpi ne, %8, %9 : vector<1x288xi32>
    %c0_i32_4 = arith.constant 0 : i32
    %11 = vector.broadcast %c0_i32_4 : i32 to vector<1x288xi32>
    %12 = arith.cmpi slt, %8, %11 : vector<1x288xi32>
    %c0_i32_5 = arith.constant 0 : i32
    %13 = arith.cmpi slt, %6, %c0_i32_5 : i32
    %14 = vector.broadcast %13 : i1 to vector<1x288xi1>
    %15 = vector.broadcast %14 : vector<1x288xi1> to vector<1x288xi1>
    %16 = arith.xori %12, %15 : vector<1x288xi1>
    %17 = arith.andi %16, %10 : vector<1x288xi1>
    %18 = vector.broadcast %6 : i32 to vector<1x288xi32>
    %19 = arith.addi %8, %18 : vector<1x288xi32>
    %20 = arith.select %17, %19, %8 : vector<1x288xi1>, vector<1x288xi32>
    %c16_i32 = arith.constant 16 : i32
    %21 = vector.broadcast %c16_i32 : i32 to vector<1x288xi32>
    %22 = arith.cmpi slt, %20, %21 : vector<1x288xi32>
    %c0_6 = arith.constant 0 : index
    %c0_7 = arith.constant 0 : index
    %c0_8 = arith.constant 0 : index
    %23 = vector.load %arg1[%c0_6, %c0_7, %c0_8] : memref<1x4x288xf32, #tpu.memory_space<vmem>>, vector<1x4x288xf32>
    %24 = vector.shape_cast %23 : vector<1x4x288xf32> to vector<4x288xf32>
    %c0_9 = arith.constant 0 : index
    %c19 = arith.constant 19 : index
    %25 = vector.load %arg11[%c0_9, %c19] : memref<32x326xf32, #tpu.memory_space<vmem>>, vector<4x288xf32>
    tpu.vector_store %arg11[%c0_9, %c19], %24 {strides = array<i32>} : memref<32x326xf32, #tpu.memory_space<vmem>>, vector<4x288xf32>,
    %c0_10 = arith.constant 0 : index
    %c0_11 = arith.constant 0 : index
    %c0_12 = arith.constant 0 : index
    %26 = vector.load %arg2[%c0_10, %c0_11, %c0_12] : memref<1x1x288xf32, #tpu.memory_space<vmem>>, vector<1x1x288xf32>
    %27 = vector.shape_cast %26 : vector<1x1x288xf32> to vector<1x288xf32>
    %c4 = arith.constant 4 : index
    %c19_13 = arith.constant 19 : index
    %28 = vector.load %arg11[%c4, %c19_13] : memref<32x326xf32, #tpu.memory_space<vmem>>, vector<1x288xf32>
    tpu.vector_store %arg11[%c4, %c19_13], %27 {strides = array<i32>} : memref<32x326xf32, #tpu.memory_space<vmem>>, vector<1x288xf32>,
    %c0_14 = arith.constant 0 : index
    %c0_15 = arith.constant 0 : index
    %29 = vector.load %arg11[%c0_14, %c0_15] : memref<32x326xf32, #tpu.memory_space<vmem>>, vector<5x288xf32>
    %c0_16 = arith.constant 0 : index
    %c1 = arith.constant 1 : index
    %30 = vector.load %arg11[%c0_16, %c1] : memref<32x326xf32, #tpu.memory_space<vmem>>, vector<5x288xf32>
    %c0_17 = arith.constant 0 : index
    %c2 = arith.constant 2 : index
    %31 = vector.load %arg11[%c0_17, %c2] : memref<32x326xf32, #tpu.memory_space<vmem>>, vector<5x288xf32>
    %c0_18 = arith.constant 0 : index
    %c18 = arith.constant 18 : index
    %32 = vector.load %arg11[%c0_18, %c18] : memref<32x326xf32, #tpu.memory_space<vmem>>, vector<5x288xf32>
    %c0_19 = arith.constant 0 : index
    %c19_20 = arith.constant 19 : index
    %33 = vector.load %arg11[%c0_19, %c19_20] : memref<32x326xf32, #tpu.memory_space<vmem>>, vector<5x288xf32>
    %c0_21 = arith.constant 0 : index
    %c20 = arith.constant 20 : index
    %34 = vector.load %arg11[%c0_21, %c20] : memref<32x326xf32, #tpu.memory_space<vmem>>, vector<5x288xf32>
    %c0_22 = arith.constant 0 : index
    %c36 = arith.constant 36 : index
    %35 = vector.load %arg11[%c0_22, %c36] : memref<32x326xf32, #tpu.memory_space<vmem>>, vector<5x288xf32>
    %c0_23 = arith.constant 0 : index
    %c37 = arith.constant 37 : index
    %36 = vector.load %arg11[%c0_23, %c37] : memref<32x326xf32, #tpu.memory_space<vmem>>, vector<5x288xf32>
    %c0_24 = arith.constant 0 : index
    %c38 = arith.constant 38 : index
    %37 = vector.load %arg11[%c0_24, %c38] : memref<32x326xf32, #tpu.memory_space<vmem>>, vector<5x288xf32>
    %38 = tpu.concatenate %29, %30, %31, %32, %33, %34, %35, %36, %37 in 0 : vector<5x288xf32>, vector<5x288xf32>, vector<5x288xf32>, vector<5x288xf32>, vector<5x288xf32>, vector<5x288xf32>, vector<5x288xf32>, vector<5x288xf32>, vector<5x288xf32> -> vector<45x288xf32>
    %c0_25 = arith.constant 0 : index
    %c0_26 = arith.constant 0 : index
    %39 = vector.load %arg3[%c0_25, %c0_26] : memref<32x45xf32, #tpu.memory_space<vmem>>, vector<32x45xf32>
    %cst_27 = arith.constant dense<0.000000e+00> : vector<32x288xf32>
    %40 = tpu.matmul %39, %38, %cst_27 {dimension_numbers = #tpu.dot_dimension_numbers<[1], [0], [0], [1], [0, 0, 1, 1], [], []>} : vector<32x45xf32>, vector<45x288xf32>, vector<32x288xf32> -> vector<32x288xf32>
    %c0_28 = arith.constant 0 : index
    %c0_29 = arith.constant 0 : index
    %41 = vector.load %arg4[%c0_28, %c0_29] : memref<32x1xf32, #tpu.memory_space<vmem>>, vector<32x1xf32>
    %42 = vector.broadcast %41 : vector<32x1xf32> to vector<32x288xf32>
    %43 = arith.addf %40, %42 : vector<32x288xf32>
    %cst_30 = arith.constant 0.000000e+00 : f32
    %44 = vector.broadcast %cst_30 : f32 to vector<32x288xf32>
    %45 = arith.cmpf ogt, %43, %44 : vector<32x288xf32>
    %c0_31 = arith.constant 0 : index
    %46 = memref.load %arg9[%c0_31] : memref<2xf32, #tpu.memory_space<smem>>
    %47 = vector.broadcast %46 : f32 to vector<32x288xf32>
    %48 = arith.mulf %47, %43 : vector<32x288xf32>
    %49 = arith.select %45, %43, %48 : vector<32x288xi1>, vector<32x288xf32>
    %cst_32 = arith.constant 0.000000e+00 : f32
    %50 = vector.shape_cast %22 : vector<1x288xi1> to vector<1x288xi1>
    %51 = vector.broadcast %50 : vector<1x288xi1> to vector<32x288xi1>
    %52 = vector.broadcast %cst_32 : f32 to vector<32x288xf32>
    %53 = arith.select %51, %49, %52 : vector<32x288xi1>, vector<32x288xf32>
    %c0_33 = arith.constant 0 : index
    %c19_34 = arith.constant 19 : index
    %54 = vector.load %arg11[%c0_33, %c19_34] : memref<32x326xf32, #tpu.memory_space<vmem>>, vector<32x288xf32>
    tpu.vector_store %arg11[%c0_33, %c19_34], %53 {strides = array<i32>} : memref<32x326xf32, #tpu.memory_space<vmem>>, vector<32x288xf32>,
    %c0_35 = arith.constant 0 : index
    %c0_36 = arith.constant 0 : index
    %55 = vector.load %arg11[%c0_35, %c0_36] : memref<32x326xf32, #tpu.memory_space<vmem>>, vector<32x288xf32>
    %c0_37 = arith.constant 0 : index
    %c1_38 = arith.constant 1 : index
    %56 = vector.load %arg11[%c0_37, %c1_38] : memref<32x326xf32, #tpu.memory_space<vmem>>, vector<32x288xf32>
    %c0_39 = arith.constant 0 : index
    %c2_40 = arith.constant 2 : index
    %57 = vector.load %arg11[%c0_39, %c2_40] : memref<32x326xf32, #tpu.memory_space<vmem>>, vector<32x288xf32>
    %c0_41 = arith.constant 0 : index
    %c18_42 = arith.constant 18 : index
    %58 = vector.load %arg11[%c0_41, %c18_42] : memref<32x326xf32, #tpu.memory_space<vmem>>, vector<32x288xf32>
    %c0_43 = arith.constant 0 : index
    %c19_44 = arith.constant 19 : index
    %59 = vector.load %arg11[%c0_43, %c19_44] : memref<32x326xf32, #tpu.memory_space<vmem>>, vector<32x288xf32>
    %c0_45 = arith.constant 0 : index
    %c20_46 = arith.constant 20 : index
    %60 = vector.load %arg11[%c0_45, %c20_46] : memref<32x326xf32, #tpu.memory_space<vmem>>, vector<32x288xf32>
    %c0_47 = arith.constant 0 : index
    %c36_48 = arith.constant 36 : index
    %61 = vector.load %arg11[%c0_47, %c36_48] : memref<32x326xf32, #tpu.memory_space<vmem>>, vector<32x288xf32>
    %c0_49 = arith.constant 0 : index
    %c37_50 = arith.constant 37 : index
    %62 = vector.load %arg11[%c0_49, %c37_50] : memref<32x326xf32, #tpu.memory_space<vmem>>, vector<32x288xf32>
    %c0_51 = arith.constant 0 : index
    %c38_52 = arith.constant 38 : index
    %63 = vector.load %arg11[%c0_51, %c38_52] : memref<32x326xf32, #tpu.memory_space<vmem>>, vector<32x288xf32>
    %64 = tpu.concatenate %55, %56, %57, %58, %59, %60, %61, %62, %63 in 0 : vector<32x288xf32>, vector<32x288xf32>, vector<32x288xf32>, vector<32x288xf32>, vector<32x288xf32>, vector<32x288xf32>, vector<32x288xf32>, vector<32x288xf32>, vector<32x288xf32> -> vector<288x288xf32>
    %c0_53 = arith.constant 0 : index
    %c0_54 = arith.constant 0 : index
    %65 = vector.load %arg5[%c0_53, %c0_54] : memref<32x288xf32, #tpu.memory_space<vmem>>, vector<32x288xf32>
    %cst_55 = arith.constant dense<0.000000e+00> : vector<32x288xf32>
    %66 = tpu.matmul %65, %64, %cst_55 {dimension_numbers = #tpu.dot_dimension_numbers<[1], [0], [0], [1], [0, 0, 1, 1], [], []>} : vector<32x288xf32>, vector<288x288xf32>, vector<32x288xf32> -> vector<32x288xf32>
    %c0_56 = arith.constant 0 : index
    %c0_57 = arith.constant 0 : index
    %67 = vector.load %arg6[%c0_56, %c0_57] : memref<32x1xf32, #tpu.memory_space<vmem>>, vector<32x1xf32>
    %68 = vector.broadcast %67 : vector<32x1xf32> to vector<32x288xf32>
    %69 = arith.addf %66, %68 : vector<32x288xf32>
    %cst_58 = arith.constant 0.000000e+00 : f32
    %70 = vector.broadcast %cst_58 : f32 to vector<32x288xf32>
    %71 = arith.cmpf ogt, %69, %70 : vector<32x288xf32>
    %c1_59 = arith.constant 1 : index
    %72 = memref.load %arg9[%c1_59] : memref<2xf32, #tpu.memory_space<smem>>
    %73 = vector.broadcast %72 : f32 to vector<32x288xf32>
    %74 = arith.mulf %73, %69 : vector<32x288xf32>
    %75 = arith.select %71, %69, %74 : vector<32x288xi1>, vector<32x288xf32>
    %cst_60 = arith.constant 0.000000e+00 : f32
    %76 = vector.shape_cast %22 : vector<1x288xi1> to vector<1x288xi1>
    %77 = vector.broadcast %76 : vector<1x288xi1> to vector<32x288xi1>
    %78 = vector.broadcast %cst_60 : f32 to vector<32x288xf32>
    %79 = arith.select %77, %75, %78 : vector<32x288xi1>, vector<32x288xf32>
    %c0_61 = arith.constant 0 : index
    %c19_62 = arith.constant 19 : index
    %80 = vector.load %arg11[%c0_61, %c19_62] : memref<32x326xf32, #tpu.memory_space<vmem>>, vector<32x288xf32>
    tpu.vector_store %arg11[%c0_61, %c19_62], %79 {strides = array<i32>} : memref<32x326xf32, #tpu.memory_space<vmem>>, vector<32x288xf32>,
    %c0_63 = arith.constant 0 : index
    %c0_64 = arith.constant 0 : index
    %81 = vector.load %arg11[%c0_63, %c0_64] : memref<32x326xf32, #tpu.memory_space<vmem>>, vector<32x288xf32>
    %c0_65 = arith.constant 0 : index
    %c1_66 = arith.constant 1 : index
    %82 = vector.load %arg11[%c0_65, %c1_66] : memref<32x326xf32, #tpu.memory_space<vmem>>, vector<32x288xf32>
    %c0_67 = arith.constant 0 : index
    %c2_68 = arith.constant 2 : index
    %83 = vector.load %arg11[%c0_67, %c2_68] : memref<32x326xf32, #tpu.memory_space<vmem>>, vector<32x288xf32>
    %c0_69 = arith.constant 0 : index
    %c18_70 = arith.constant 18 : index
    %84 = vector.load %arg11[%c0_69, %c18_70] : memref<32x326xf32, #tpu.memory_space<vmem>>, vector<32x288xf32>
    %c0_71 = arith.constant 0 : index
    %c19_72 = arith.constant 19 : index
    %85 = vector.load %arg11[%c0_71, %c19_72] : memref<32x326xf32, #tpu.memory_space<vmem>>, vector<32x288xf32>
    %c0_73 = arith.constant 0 : index
    %c20_74 = arith.constant 20 : index
    %86 = vector.load %arg11[%c0_73, %c20_74] : memref<32x326xf32, #tpu.memory_space<vmem>>, vector<32x288xf32>
    %c0_75 = arith.constant 0 : index
    %c36_76 = arith.constant 36 : index
    %87 = vector.load %arg11[%c0_75, %c36_76] : memref<32x326xf32, #tpu.memory_space<vmem>>, vector<32x288xf32>
    %c0_77 = arith.constant 0 : index
    %c37_78 = arith.constant 37 : index
    %88 = vector.load %arg11[%c0_77, %c37_78] : memref<32x326xf32, #tpu.memory_space<vmem>>, vector<32x288xf32>
    %c0_79 = arith.constant 0 : index
    %c38_80 = arith.constant 38 : index
    %89 = vector.load %arg11[%c0_79, %c38_80] : memref<32x326xf32, #tpu.memory_space<vmem>>, vector<32x288xf32>
    %90 = tpu.concatenate %81, %82, %83, %84, %85, %86, %87, %88, %89 in 0 : vector<32x288xf32>, vector<32x288xf32>, vector<32x288xf32>, vector<32x288xf32>, vector<32x288xf32>, vector<32x288xf32>, vector<32x288xf32>, vector<32x288xf32>, vector<32x288xf32> -> vector<288x288xf32>
    %c0_81 = arith.constant 0 : index
    %c0_82 = arith.constant 0 : index
    %91 = vector.load %arg7[%c0_81, %c0_82] : memref<4x288xf32, #tpu.memory_space<vmem>>, vector<4x288xf32>
    %cst_83 = arith.constant dense<0.000000e+00> : vector<4x288xf32>
    %92 = tpu.matmul %91, %90, %cst_83 {dimension_numbers = #tpu.dot_dimension_numbers<[1], [0], [0], [1], [0, 0, 1, 1], [], []>} : vector<4x288xf32>, vector<288x288xf32>, vector<4x288xf32> -> vector<4x288xf32>
    %c0_84 = arith.constant 0 : index
    %c0_85 = arith.constant 0 : index
    %93 = vector.load %arg8[%c0_84, %c0_85] : memref<4x1xf32, #tpu.memory_space<vmem>>, vector<4x1xf32>
    %94 = vector.broadcast %93 : vector<4x1xf32> to vector<4x288xf32>
    %95 = arith.addf %92, %94 : vector<4x288xf32>
    %c0_86 = arith.constant 0 : index
    %c0_87 = arith.constant 0 : index
    %c0_88 = arith.constant 0 : index
    %96 = vector.load %arg1[%c0_86, %c0_87, %c0_88] : memref<1x4x288xf32, #tpu.memory_space<vmem>>, vector<1x4x288xf32>
    %97 = vector.shape_cast %96 : vector<1x4x288xf32> to vector<4x288xf32>
    %98 = arith.addf %97, %95 : vector<4x288xf32>
    %c0_89 = arith.constant 0 : index
    %c0_90 = arith.constant 0 : index
    %c0_91 = arith.constant 0 : index
    %99 = vector.load %arg10[%c0_89, %c0_90, %c0_91] : memref<1x4x288xf32, #tpu.memory_space<vmem>>, vector<1x4x288xf32>
    %100 = vector.shape_cast %99 : vector<1x4x288xf32> to vector<4x288xf32>
    %101 = vector.shape_cast %98 : vector<4x288xf32> to vector<1x4x288xf32>
    tpu.vector_store %arg10[%c0_89, %c0_90, %c0_91], %101 {strides = array<i32>} : memref<1x4x288xf32, #tpu.memory_space<vmem>>, vector<1x4x288xf32>,
    return
  }
  func.func @transform_0(%arg0: i32) -> (i32, i32, i32) {
    %c0_i32 = arith.constant 0 : i32
    %c0_i32_0 = arith.constant 0 : i32
    %c0_i32_1 = arith.constant 0 : i32
    return %arg0, %c0_i32, %c0_i32_0 : i32, i32, i32
  }
  func.func @transform_1(%arg0: i32) -> (i32, i32, i32) {
    %c0_i32 = arith.constant 0 : i32
    %c0_i32_0 = arith.constant 0 : i32
    %c0_i32_1 = arith.constant 0 : i32
    return %arg0, %c0_i32, %c0_i32_0 : i32, i32, i32
  }
  func.func @transform_2(%arg0: i32) -> (i32, i32) {
    %c0_i32 = arith.constant 0 : i32
    %c0_i32_0 = arith.constant 0 : i32
    %c0_i32_1 = arith.constant 0 : i32
    return %c0_i32, %c0_i32_0 : i32, i32
  }
  func.func @transform_3(%arg0: i32) -> (i32, i32) {
    %c0_i32 = arith.constant 0 : i32
    %c0_i32_0 = arith.constant 0 : i32
    %c0_i32_1 = arith.constant 0 : i32
    return %c0_i32, %c0_i32_0 : i32, i32
  }
  func.func @transform_4(%arg0: i32) -> (i32, i32) {
    %c0_i32 = arith.constant 0 : i32
    %c0_i32_0 = arith.constant 0 : i32
    %c0_i32_1 = arith.constant 0 : i32
    return %c0_i32, %c0_i32_0 : i32, i32
  }
  func.func @transform_5(%arg0: i32) -> (i32, i32) {
    %c0_i32 = arith.constant 0 : i32
    %c0_i32_0 = arith.constant 0 : i32
    %c0_i32_1 = arith.constant 0 : i32
    return %c0_i32, %c0_i32_0 : i32, i32
  }
  func.func @transform_6(%arg0: i32) -> (i32, i32) {
    %c0_i32 = arith.constant 0 : i32
    %c0_i32_0 = arith.constant 0 : i32
    %c0_i32_1 = arith.constant 0 : i32
    return %c0_i32, %c0_i32_0 : i32, i32
  }
  func.func @transform_7(%arg0: i32) -> (i32, i32) {
    %c0_i32 = arith.constant 0 : i32
    %c0_i32_0 = arith.constant 0 : i32
    %c0_i32_1 = arith.constant 0 : i32
    return %c0_i32, %c0_i32_0 : i32, i32
  }
  func.func @transform_8(%arg0: i32) -> i32 {
    %c0_i32 = arith.constant 0 : i32
    %c0_i32_0 = arith.constant 0 : i32
    return %c0_i32 : i32
  }
  func.func @transform_9(%arg0: i32) -> (i32, i32, i32) {
    %c0_i32 = arith.constant 0 : i32
    %c0_i32_0 = arith.constant 0 : i32
    %c0_i32_1 = arith.constant 0 : i32
    return %arg0, %c0_i32, %c0_i32_0 : i32, i32, i32
  }
}

</mosaic_0001>

<llo_original>
// kernel: primal_module_forward.2
$region0: #{primal_module_forward.2}
  #allocation0 [shape = 'u32[]', space=smem, size = 0x4, offset = 0x4, fixed_abs, tag = 'smem constant byte address 0x4 - core index']
  #allocation1 [shape = 'u32[144,128]{1,0:T(1,128)}', space=vmem, size = 0x12000, scoped, tag = 'internal scratch']
  #allocation2 [shape = 'f32[2,256]{1,0:T(2,128)}', space=vmem, size = 0x800, scoped, tag = 'scratch operand']
  %s0 = inlined_call_operand.vmem [shape: f32[2,256], index: 0, kind: input, shape index: {}]
  %s1 = inlined_call_operand.vmem [shape: f32[256,256], index: 1, kind: input, shape index: {}]
  %s2 = inlined_call_operand.vmem [shape: f32[2,256], index: 2, kind: output, shape index: {}]
  %s3 = sld [smem:[#allocation0]]
  $region26: #{primal_module_forward.2} parent=0
    _
  %s5 = ssub.s32 1, %s3
  %s6 = scalar_select 0, %s5, %s3
  // Predicated region
  $region2: #{primal_module_forward.2} parent=0 // pred_check
    _
  $region3: #{primal_module_forward.2} parent=0 // pred_check_branch
    %8 = sbr.rel (0) target = $region5
  $region4: #{primal_module_forward.2} parent=0 // pred_region
    _
  $region5: #{primal_module_forward.2} parent=0 // pred_fallthru
    _
  // Predicated region
  $region6: #{primal_module_forward.2} parent=0 // pred_check
    _
  $region7: #{primal_module_forward.2} parent=0 // pred_check_branch
    %10 = sbr.rel (0) target = $region9
  $region8: #{primal_module_forward.2} parent=0 // pred_region
    _
  $region9: #{primal_module_forward.2} parent=0 // pred_fallthru
    _
  %p11 = scmp.eq.s32.totalorder 0, 0
  // Predicated region
  $region10: #{primal_module_forward.2} parent=0 // pred_check
    %p12 = pneg %p11
  $region11: #{primal_module_forward.2} parent=0 // pred_check_branch
    %14 = sbr.rel (%p12) target = $region13
  $region12: #{primal_module_forward.2} parent=0 // pred_region
    %15 = vst [vmem:[#allocation2] sm:$0xf] 0.0
  $region13: #{primal_module_forward.2} parent=0 // pred_fallthru
    _
  %v16 = vld [vmem:[#allocation2] sm:$0xf]
  %v17 = vld [vmem:[%s0] sm:$0xf]
  %v18 = vld [vmem:[%s1] sm:$0xff]
  %v19 = vld [vmem:[%s1 + $0x8] sm:$0xff]
  %v20 = vld [vmem:[%s1 + $0x10] sm:$0xff]
  %v21 = vld [vmem:[%s1 + $0x18] sm:$0xff]
  %v22 = vld [vmem:[%s1 + $0x20] sm:$0xff]
  %v23 = vld [vmem:[%s1 + $0x28] sm:$0xff]
  %v24 = vld [vmem:[%s1 + $0x30] sm:$0xff]
  %v25 = vld [vmem:[%s1 + $0x38] sm:$0xff]
  %v26 = vld [vmem:[%s1 + $0x40] sm:$0xff]
  %v27 = vld [vmem:[%s1 + $0x48] sm:$0xff]
  %v28 = vld [vmem:[%s1 + $0x50] sm:$0xff]
  %v29 = vld [vmem:[%s1 + $0x58] sm:$0xff]
  %v30 = vld [vmem:[%s1 + $0x60] sm:$0xff]
  %v31 = vld [vmem:[%s1 + $0x68] sm:$0xff]
  %v32 = vld [vmem:[%s1 + $0x70] sm:$0xff]
  %v33 = vld [vmem:[%s1 + $0x78] sm:$0xff]
  %v34 = vld [vmem:[%s1 + $0x80] sm:$0xff]
  %v35 = vld [vmem:[%s1 + $0x88] sm:$0xff]
  %v36 = vld [vmem:[%s1 + $0x90] sm:$0xff]
  %v37 = vld [vmem:[%s1 + $0x98] sm:$0xff]
  %v38 = vld [vmem:[%s1 + $0xa0] sm:$0xff]
  %v39 = vld [vmem:[%s1 + $0xa8] sm:$0xff]
  %v40 = vld [vmem:[%s1 + $0xb0] sm:$0xff]
  %v41 = vld [vmem:[%s1 + $0xb8] sm:$0xff]
  %v42 = vld [vmem:[%s1 + $0xc0] sm:$0xff]
  %v43 = vld [vmem:[%s1 + $0xc8] sm:$0xff]
  %v44 = vld [vmem:[%s1 + $0xd0] sm:$0xff]
  %v45 = vld [vmem:[%s1 + $0xd8] sm:$0xff]
  %v46 = vld [vmem:[%s1 + $0xe0] sm:$0xff]
  %v47 = vld [vmem:[%s1 + $0xe8] sm:$0xff]
  %v48 = vld [vmem:[%s1 + $0xf0] sm:$0xff]
  %v49 = vld [vmem:[%s1 + $0xf8] sm:$0xff]
  %v50 = vld [vmem:[%s1 + $0x100] sm:$0xff]
  %v51 = vld [vmem:[%s1 + $0x108] sm:$0xff]
  %v52 = vld [vmem:[%s1 + $0x110] sm:$0xff]
  %v53 = vld [vmem:[%s1 + $0x118] sm:$0xff]
  %v54 = vld [vmem:[%s1 + $0x120] sm:$0xff]
  %v55 = vld [vmem:[%s1 + $0x128] sm:$0xff]
  %v56 = vld [vmem:[%s1 + $0x130] sm:$0xff]
  %v57 = vld [vmem:[%s1 + $0x138] sm:$0xff]
  %v58 = vld [vmem:[%s1 + $0x140] sm:$0xff]
  %v59 = vld [vmem:[%s1 + $0x148] sm:$0xff]
  %v60 = vld [vmem:[%s1 + $0x150] sm:$0xff]
  %v61 = vld [vmem:[%s1 + $0x158] sm:$0xff]
  %v62 = vld [vmem:[%s1 + $0x160] sm:$0xff]
  %v63 = vld [vmem:[%s1 + $0x168] sm:$0xff]
  %v64 = vld [vmem:[%s1 + $0x170] sm:$0xff]
  %v65 = vld [vmem:[%s1 + $0x178] sm:$0xff]
  %v66 = vld [vmem:[%s1 + $0x180] sm:$0xff]
  %v67 = vld [vmem:[%s1 + $0x188] sm:$0xff]
  %v68 = vld [vmem:[%s1 + $0x190] sm:$0xff]
  %v69 = vld [vmem:[%s1 + $0x198] sm:$0xff]
  %v70 = vld [vmem:[%s1 + $0x1a0] sm:$0xff]
  %v71 = vld [vmem:[%s1 + $0x1a8] sm:$0xff]
  %v72 = vld [vmem:[%s1 + $0x1b0] sm:$0xff]
  %v73 = vld [vmem:[%s1 + $0x1b8] sm:$0xff]
  %v74 = vld [vmem:[%s1 + $0x1c0] sm:$0xff]
  %v75 = vld [vmem:[%s1 + $0x1c8] sm:$0xff]
  %v76 = vld [vmem:[%s1 + $0x1d0] sm:$0xff]
  %v77 = vld [vmem:[%s1 + $0x1d8] sm:$0xff]
  %v78 = vld [vmem:[%s1 + $0x1e0] sm:$0xff]
  %v79 = vld [vmem:[%s1 + $0x1e8] sm:$0xff]
  %v80 = vld [vmem:[%s1 + $0x1f0] sm:$0xff]
  %v81 = vld [vmem:[%s1 + $0x1f8] sm:$0xff]
  %v84 = vunpack.c.l.s4 1983009808
  %v85 = vunpack.c.0.s8 %v84
  %v86 = vlaneseq
  %v87 = vshrl.u32 %v86, 7
  %v88 = vsub.s32 %v85, %v87
  %v89 = vrot.slane %v17, %v88
  %v90 = vcombine.high %v89, %v89
  %93 = vmatprep.subr.mxu0 %v49
  %94 = vmatpush1.msra.mxu0 %v48
  %95 = vmatprep.subr.mxu0 %v47
  %96 = vmatpush1.msra.mxu0 %v46
  %97 = vmatprep.subr.mxu0 %v45
  %98 = vmatpush1.msra.mxu0 %v44
  %99 = vmatprep.subr.mxu0 %v43
  %100 = vmatpush1.msra.mxu0 %v42
  %101 = vmatprep.subr.mxu0 %v41
  %102 = vmatpush1.msra.mxu0 %v40
  %103 = vmatprep.subr.mxu0 %v39
  %104 = vmatpush1.msra.mxu0 %v38
  %105 = vmatprep.subr.mxu0 %v37
  %106 = vmatpush1.msra.mxu0 %v36
  %107 = vmatprep.subr.mxu0 %v35
  %108 = vmatpush1.msra.mxu0 %v34
  %109 = vmatprep.subr.mxu0 %v33
  %110 = vmatpush1.msra.mxu0 %v32
  %111 = vmatprep.subr.mxu0 %v31
  %112 = vmatpush1.msra.mxu0 %v30
  %113 = vmatprep.subr.mxu0 %v29
  %114 = vmatpush1.msra.mxu0 %v28
  %115 = vmatprep.subr.mxu0 %v27
  %116 = vmatpush1.msra.mxu0 %v26
  %117 = vmatprep.subr.mxu0 %v25
  %118 = vmatpush1.msra.mxu0 %v24
  %119 = vmatprep.subr.mxu0 %v23
  %120 = vmatpush1.msra.mxu0 %v22
  %121 = vmatprep.subr.mxu0 %v21
  %122 = vmatpush1.msra.mxu0 %v20
  %123 = vmatprep.subr.mxu0 %v19
  %124 = vmatpush1.msra.mxu0 %v18
  %125 = vmatprep.subr.mxu0 %v81
  %126 = vmatpush2.msra.mxu0 %v80
  %127 = vmatprep.subr.mxu0 %v79
  %128 = vmatpush2.msra.mxu0 %v78
  %129 = vmatprep.subr.mxu0 %v77
  %130 = vmatpush2.msra.mxu0 %v76
  %131 = vmatprep.subr.mxu0 %v75
  %132 = vmatpush2.msra.mxu0 %v74
  %133 = vmatprep.subr.mxu0 %v73
  %134 = vmatpush2.msra.mxu0 %v72
  %135 = vmatprep.subr.mxu0 %v71
  %136 = vmatpush2.msra.mxu0 %v70
  %137 = vmatprep.subr.mxu0 %v69
  %138 = vmatpush2.msra.mxu0 %v68
  %139 = vmatprep.subr.mxu0 %v67
  %140 = vmatpush2.msra.mxu0 %v66
  %141 = vmatprep.subr.mxu0 %v65
  %142 = vmatpush2.msra.mxu0 %v64
  %143 = vmatprep.subr.mxu0 %v63
  %144 = vmatpush2.msra.mxu0 %v62
  %145 = vmatprep.subr.mxu0 %v61
  %146 = vmatpush2.msra.mxu0 %v60
  %147 = vmatprep.subr.mxu0 %v59
  %148 = vmatpush2.msra.mxu0 %v58
  %149 = vmatprep.subr.mxu0 %v57
  %150 = vmatpush2.msra.mxu0 %v56
  %151 = vmatprep.subr.mxu0 %v55
  %152 = vmatpush2.msra.mxu0 %v54
  %153 = vmatprep.subr.mxu0 %v53
  %154 = vmatpush2.msra.mxu0 %v52
  %155 = vmatprep.subr.mxu0 %v51
  %156 = vmatpush2.msra.mxu0 %v50
  %157 = vmatprep.mubr.f32.mxu0 %v90
  %158 = vmatmul.mubr.f32.gmra.mxu0 %v89
  %v159 = vpop.f32.mrf.mxu0
  %v160 = vadd.f32 0.0, %v159
  %v161 = vpop.f32.mrf.mxu0
  %v162 = vadd.f32 0.0, %v161
  %163 = vdwg.mxu0
  %v166 = vcombine.low %v160, %v162
  %v168 = vunpack.c.l.s4 1983009808
  %v169 = vunpack.c.0.s8 %v168
  %v170 = vlaneseq
  %v171 = vshrl.u32 %v170, 7
  %v172 = vsub.s32 %v169, %v171
  %v173 = vrot.slane %v166, %v172
  %v175 = vadd.f32 %v16, %v173
  %176 = vst [vmem:[#allocation2] sm:$0xf] %v175
  // Predicated region
  $region14: #{primal_module_forward.2} parent=0 // pred_check
    %p177 = pneg %p11
  $region15: #{primal_module_forward.2} parent=0 // pred_check_branch
    %179 = sbr.rel (%p177) target = $region17
  $region16: #{primal_module_forward.2} parent=0 // pred_region
    %v180 = vld [vmem:[#allocation2] sm:$0xf]
    %181 = vst [vmem:[%s2] sm:$0xf] %v180
  $region17: #{primal_module_forward.2} parent=0 // pred_fallthru
    _
  // Predicated region
  $region18: #{primal_module_forward.2} parent=0 // pred_check
    _
  $region19: #{primal_module_forward.2} parent=0 // pred_check_branch
    %183 = sbr.rel (0) target = $region21
  $region20: #{primal_module_forward.2} parent=0 // pred_region
    _
  $region21: #{primal_module_forward.2} parent=0 // pred_fallthru
    _
  // Predicated region
  $region22: #{primal_module_forward.2} parent=0 // pred_check
    _
  $region23: #{primal_module_forward.2} parent=0 // pred_check_branch
    %185 = sbr.rel (0) target = $region25
  $region24: #{primal_module_forward.2} parent=0 // pred_region
    _
  $region25: #{primal_module_forward.2} parent=0 // pred_fallthru
    _

// kernel: primal_module_forward.3
$region0: #{primal_module_forward.3}
  #allocation0 [shape = 'u32[]', space=smem, size = 0x4, offset = 0x4, fixed_abs, tag = 'smem constant byte address 0x4 - core index']
  #allocation1 [shape = 'u32[144,128]{1,0:T(1,128)}', space=vmem, size = 0x12000, scoped, tag = 'internal scratch']
  #allocation2 [shape = 'f32[32,326]{1,0:T(8,128)}', space=vmem, size = 0xc000, scoped, tag = 'scratch operand']
  %s0 = inlined_call_operand.vmem [shape: f32[2,4,288], index: 0, kind: input, shape index: {}]
  %s1 = inlined_call_operand.vmem [shape: f32[2,1,288], index: 1, kind: input, shape index: {}]
  %s2 = inlined_call_operand.vmem [shape: f32[32,45], index: 2, kind: input, shape index: {}]
  %s3 = inlined_call_operand.vmem [shape: f32[32,1], index: 3, kind: input, shape index: {}]
  %s4 = inlined_call_operand.vmem [shape: f32[32,288], index: 4, kind: input, shape index: {}]
  %s5 = inlined_call_operand.vmem [shape: f32[32,1], index: 5, kind: input, shape index: {}]
  %s6 = inlined_call_operand.vmem [shape: f32[4,288], index: 6, kind: input, shape index: {}]
  %s7 = inlined_call_operand.vmem [shape: f32[4,1], index: 7, kind: input, shape index: {}]
  %s8 = inlined_call_operand.vmem [shape: f32[2], index: 8, kind: input, shape index: {}]
  %s9 = inlined_call_operand.vmem [shape: f32[2,4,288], index: 9, kind: output, shape index: {}]
  %s10 = sld [smem:[#allocation0]]
  $region73: #{primal_module_forward.3} parent=0
    _
  %s12 = ssub.s32 1, %s10
  %s13 = scalar_select 0, %s12, %s10
  $region1: #{primal_module_forward.3} parent=0
    #allocation3 [shape = 'u8[512]{0}', space=smem, size = 0x200, scoped, tag = 'input window, operand 8, single buffered']
    #allocation4 [shape = 's32[2]{0}', space=sflag, size = 0x8, scoped, tag = 'scoped memory for primal_module_forward.3']
    %14 = vsyncpa [#allocation4], 0
    loop: start=0, step=1, limit=4
    $region2: #{primal_module_forward.3} parent=1 // loop_pre_header
      _
    $region3: #{primal_module_forward.3} parent=1 // loop_header
      %s16 = sphi 0, %s20
      %p17 = scmp.ge.s32.totalorder %s16, 4
      %s26 = sphi 0, %s28
      %s29 = sphi 0, %s26
      %s30 = sphi 0, %s29
      %s46 = sphi 0, %s30
      %s52 = sphi 0, %s54
      %s55 = sphi 0, %s52
      %s56 = sphi 0, %s55
      %s72 = sphi 0, %s56
      %s76 = sphi 0, %s76
      %s78 = sphi 0, %s76
      %s79 = sphi 0, %s78
      %s93 = sphi 0, %s79
      %s97 = sphi 0, %s97
      %s99 = sphi 0, %s97
      %s100 = sphi 0, %s99
      %s114 = sphi 0, %s100
      %s118 = sphi 0, %s118
      %s120 = sphi 0, %s118
      %s121 = sphi 0, %s120
      %s135 = sphi 0, %s121
      %s139 = sphi 0, %s139
      %s141 = sphi 0, %s139
      %s142 = sphi 0, %s141
      %s156 = sphi 0, %s142
      %s160 = sphi 0, %s160
      %s162 = sphi 0, %s160
      %s163 = sphi 0, %s162
      %s177 = sphi 0, %s163
      %s181 = sphi 0, %s181
      %s183 = sphi 0, %s181
      %s184 = sphi 0, %s183
      %s198 = sphi 0, %s184
      %s202 = sphi 0, %s202
      %s204 = sphi 0, %s202
      %s205 = sphi 0, %s204
      %s219 = sphi 0, %s205
      %s225 = sphi 0, %s227
      %s228 = sphi 0, %s225
      %s229 = sphi 0, %s228
      %s245 = sphi 0, %s229
    $region4: #{primal_module_forward.3} parent=1 // loop_header_branch
      %19 = sbr.rel (%p17) target = $region8
    $region5: #{primal_module_forward.3} parent=1 // loop_body
      %s21 = ssub.s32 %s16, 1
      %s22 = ssub.s32 %s16, 2
      %s23 = sadd.s32 %s16, 1
      %s24 = ssub.s32 %s16, %s23
      %p25 = scmp.eq.s32.totalorder %s24, 0
      %s27 = sadd.s32 %s26, 1
      %s28 = scalar_select %p25, %s26, %s27
      %p31 = pneg %p25
      %p32 = scmp.eq.s32.totalorder %s16, 1
      %p33 = por %p31, %p32
      %p34 = scmp.ne.s32.totalorder %s26, %s29
      %p35 = scmp.eq.s32.totalorder %s16, 0
      %p36 = por %p34, %p35
      %p37 = scmp.ne.s32.totalorder %s26, %s29
      %p38 = scmp.eq.s32.totalorder %s21, 1
      %p39 = por %p37, %p38
      %p40 = scmp.ne.s32.totalorder %s29, %s30
      %p41 = scmp.eq.s32.totalorder %s21, 0
      %p42 = por %p40, %p41
      %p43 = scmp.ne.s32.totalorder %s29, %s30
      %p44 = scmp.eq.s32.totalorder %s22, 1
      %p45 = por %p43, %p44
      %p47 = scmp.ne.s32.totalorder %s30, %s46
      %p48 = scmp.eq.s32.totalorder %s22, 0
      %p49 = por %p47, %p48
      %s50 = ssub.s32 %s16, %s23
      %p51 = scmp.eq.s32.totalorder %s50, 0
      %s53 = sadd.s32 %s52, 1
      %s54 = scalar_select %p51, %s52, %s53
      %p57 = pneg %p51
      %p58 = scmp.eq.s32.totalorder %s16, 1
      %p59 = por %p57, %p58
      %p60 = scmp.ne.s32.totalorder %s52, %s55
      %p61 = scmp.eq.s32.totalorder %s16, 0
      %p62 = por %p60, %p61
      %p63 = scmp.ne.s32.totalorder %s52, %s55
      %p64 = scmp.eq.s32.totalorder %s21, 1
      %p65 = por %p63, %p64
      %p66 = scmp.ne.s32.totalorder %s55, %s56
      %p67 = scmp.eq.s32.totalorder %s21, 0
      %p68 = por %p66, %p67
      %p69 = scmp.ne.s32.totalorder %s55, %s56
      %p70 = scmp.eq.s32.totalorder %s22, 1
      %p71 = por %p69, %p70
      %p73 = scmp.ne.s32.totalorder %s56, %s72
      %p74 = scmp.eq.s32.totalorder %s22, 0
      %p75 = por %p73, %p74
      %s77 = sadd.s32 %s76, 1
      %p80 = scmp.eq.s32.totalorder %s16, 1
      %p81 = scmp.ne.s32.totalorder %s76, %s78
      %p82 = scmp.eq.s32.totalorder %s16, 0
      %p83 = por %p81, %p82
      %p84 = scmp.ne.s32.totalorder %s76, %s78
      %p85 = scmp.eq.s32.totalorder %s21, 1
      %p86 = por %p84, %p85
      %p87 = scmp.ne.s32.totalorder %s78, %s79
      %p88 = scmp.eq.s32.totalorder %s21, 0
      %p89 = por %p87, %p88
      %p90 = scmp.ne.s32.totalorder %s78, %s79
      %p91 = scmp.eq.s32.totalorder %s22, 1
      %p92 = por %p90, %p91
      %p94 = scmp.ne.s32.totalorder %s79, %s93
      %p95 = scmp.eq.s32.totalorder %s22, 0
      %p96 = por %p94, %p95
      %s98 = sadd.s32 %s97, 1
      %p101 = scmp.eq.s32.totalorder %s16, 1
      %p102 = scmp.ne.s32.totalorder %s97, %s99
      %p103 = scmp.eq.s32.totalorder %s16, 0
      %p104 = por %p102, %p103
      %p105 = scmp.ne.s32.totalorder %s97, %s99
      %p106 = scmp.eq.s32.totalorder %s21, 1
      %p107 = por %p105, %p106
      %p108 = scmp.ne.s32.totalorder %s99, %s100
      %p109 = scmp.eq.s32.totalorder %s21, 0
      %p110 = por %p108, %p109
      %p111 = scmp.ne.s32.totalorder %s99, %s100
      %p112 = scmp.eq.s32.totalorder %s22, 1
      %p113 = por %p111, %p112
      %p115 = scmp.ne.s32.totalorder %s100, %s114
      %p116 = scmp.eq.s32.totalorder %s22, 0
      %p117 = por %p115, %p116
      %s119 = sadd.s32 %s118, 1
      %p122 = scmp.eq.s32.totalorder %s16, 1
      %p123 = scmp.ne.s32.totalorder %s118, %s120
      %p124 = scmp.eq.s32.totalorder %s16, 0
      %p125 = por %p123, %p124
      %p126 = scmp.ne.s32.totalorder %s118, %s120
      %p127 = scmp.eq.s32.totalorder %s21, 1
      %p128 = por %p126, %p127
      %p129 = scmp.ne.s32.totalorder %s120, %s121
      %p130 = scmp.eq.s32.totalorder %s21, 0
      %p131 = por %p129, %p130
      %p132 = scmp.ne.s32.totalorder %s120, %s121
      %p133 = scmp.eq.s32.totalorder %s22, 1
      %p134 = por %p132, %p133
      %p136 = scmp.ne.s32.totalorder %s121, %s135
      %p137 = scmp.eq.s32.totalorder %s22, 0
      %p138 = por %p136, %p137
      %s140 = sadd.s32 %s139, 1
      %p143 = scmp.eq.s32.totalorder %s16, 1
      %p144 = scmp.ne.s32.totalorder %s139, %s141
      %p145 = scmp.eq.s32.totalorder %s16, 0
      %p146 = por %p144, %p145
      %p147 = scmp.ne.s32.totalorder %s139, %s141
      %p148 = scmp.eq.s32.totalorder %s21, 1
      %p149 = por %p147, %p148
      %p150 = scmp.ne.s32.totalorder %s141, %s142
      %p151 = scmp.eq.s32.totalorder %s21, 0
      %p152 = por %p150, %p151
      %p153 = scmp.ne.s32.totalorder %s141, %s142
      %p154 = scmp.eq.s32.totalorder %s22, 1
      %p155 = por %p153, %p154
      %p157 = scmp.ne.s32.totalorder %s142, %s156
      %p158 = scmp.eq.s32.totalorder %s22, 0
      %p159 = por %p157, %p158
      %s161 = sadd.s32 %s160, 1
      %p164 = scmp.eq.s32.totalorder %s16, 1
      %p165 = scmp.ne.s32.totalorder %s160, %s162
      %p166 = scmp.eq.s32.totalorder %s16, 0
      %p167 = por %p165, %p166
      %p168 = scmp.ne.s32.totalorder %s160, %s162
      %p169 = scmp.eq.s32.totalorder %s21, 1
      %p170 = por %p168, %p169
      %p171 = scmp.ne.s32.totalorder %s162, %s163
      %p172 = scmp.eq.s32.totalorder %s21, 0
      %p173 = por %p171, %p172
      %p174 = scmp.ne.s32.totalorder %s162, %s163
      %p175 = scmp.eq.s32.totalorder %s22, 1
      %p176 = por %p174, %p175
      %p178 = scmp.ne.s32.totalorder %s163, %s177
      %p179 = scmp.eq.s32.totalorder %s22, 0
      %p180 = por %p178, %p179
      %s182 = sadd.s32 %s181, 1
      %p185 = scmp.eq.s32.totalorder %s16, 1
      %p186 = scmp.ne.s32.totalorder %s181, %s183
      %p187 = scmp.eq.s32.totalorder %s16, 0
      %p188 = por %p186, %p187
      %p189 = scmp.ne.s32.totalorder %s181, %s183
      %p190 = scmp.eq.s32.totalorder %s21, 1
      %p191 = por %p189, %p190
      %p192 = scmp.ne.s32.totalorder %s183, %s184
      %p193 = scmp.eq.s32.totalorder %s21, 0
      %p194 = por %p192, %p193
      %p195 = scmp.ne.s32.totalorder %s183, %s184
      %p196 = scmp.eq.s32.totalorder %s22, 1
      %p197 = por %p195, %p196
      %p199 = scmp.ne.s32.totalorder %s184, %s198
      %p200 = scmp.eq.s32.totalorder %s22, 0
      %p201 = por %p199, %p200
      %s203 = sadd.s32 %s202, 1
      %p206 = scmp.eq.s32.totalorder %s16, 1
      %p207 = scmp.ne.s32.totalorder %s202, %s204
      %p208 = scmp.eq.s32.totalorder %s16, 0
      %p209 = por %p207, %p208
      %p210 = scmp.ne.s32.totalorder %s202, %s204
      %p211 = scmp.eq.s32.totalorder %s21, 1
      %p212 = por %p210, %p211
      %p213 = scmp.ne.s32.totalorder %s204, %s205
      %p214 = scmp.eq.s32.totalorder %s21, 0
      %p215 = por %p213, %p214
      %p216 = scmp.ne.s32.totalorder %s204, %s205
      %p217 = scmp.eq.s32.totalorder %s22, 1
      %p218 = por %p216, %p217
      %p220 = scmp.ne.s32.totalorder %s205, %s219
      %p221 = scmp.eq.s32.totalorder %s22, 0
      %p222 = por %p220, %p221
      %s223 = ssub.s32 %s16, %s23
      %p224 = scmp.eq.s32.totalorder %s223, 0
      %s226 = sadd.s32 %s225, 1
      %s227 = scalar_select %p224, %s225, %s226
      %p230 = pneg %p224
      %p231 = scmp.eq.s32.totalorder %s16, 1
      %p232 = por %p230, %p231
      %p233 = scmp.ne.s32.totalorder %s225, %s228
      %p234 = scmp.eq.s32.totalorder %s16, 0
      %p235 = por %p233, %p234
      %p236 = scmp.ne.s32.totalorder %s225, %s228
      %p237 = scmp.eq.s32.totalorder %s21, 1
      %p238 = por %p236, %p237
      %p239 = scmp.ne.s32.totalorder %s228, %s229
      %p240 = scmp.eq.s32.totalorder %s21, 0
      %p241 = por %p239, %p240
      %p242 = scmp.ne.s32.totalorder %s228, %s229
      %p243 = scmp.eq.s32.totalorder %s22, 1
      %p244 = por %p242, %p243
      %p246 = scmp.ne.s32.totalorder %s229, %s245
      %p247 = scmp.eq.s32.totalorder %s22, 0
      %p248 = por %p246, %p247
      %p249 = scmp.le.s32.totalorder 1, %s16
      %p250 = scmp.lt.s32.totalorder %s16, 3
      %p251 = pnand %p249, %p250
      %p252 = pneg %p251
      // Predicated region
      $region9: #{primal_module_forward.3} parent=5 // pred_check
        _
      $region10: #{primal_module_forward.3} parent=5 // pred_check_branch
        %254 = sbr.rel (%p251) target = $region12
      $region11: #{primal_module_forward.3} parent=5 // pred_region
        %s255 = ssub.s32 %s16, 1
        // Predicated region
        $region13: #{primal_module_forward.3} parent=11 // pred_check
          %p256 = pneg %p89
        $region14: #{primal_module_forward.3} parent=11 // pred_check_branch
          %258 = sbr.rel (%p256) target = $region16
        $region15: #{primal_module_forward.3} parent=11 // pred_region
          _
        $region16: #{primal_module_forward.3} parent=11 // pred_fallthru
          _
        // Predicated region
        $region17: #{primal_module_forward.3} parent=11 // pred_check
          %p259 = pneg %p110
        $region18: #{primal_module_forward.3} parent=11 // pred_check_branch
          %261 = sbr.rel (%p259) target = $region20
        $region19: #{primal_module_forward.3} parent=11 // pred_region
          _
        $region20: #{primal_module_forward.3} parent=11 // pred_fallthru
          _
        // Predicated region
        $region21: #{primal_module_forward.3} parent=11 // pred_check
          %p262 = pneg %p131
        $region22: #{primal_module_forward.3} parent=11 // pred_check_branch
          %264 = sbr.rel (%p262) target = $region24
        $region23: #{primal_module_forward.3} parent=11 // pred_region
          _
        $region24: #{primal_module_forward.3} parent=11 // pred_fallthru
          _
        // Predicated region
        $region25: #{primal_module_forward.3} parent=11 // pred_check
          %p265 = pneg %p152
        $region26: #{primal_module_forward.3} parent=11 // pred_check_branch
          %267 = sbr.rel (%p265) target = $region28
        $region27: #{primal_module_forward.3} parent=11 // pred_region
          _
        $region28: #{primal_module_forward.3} parent=11 // pred_fallthru
          _
        // Predicated region
        $region29: #{primal_module_forward.3} parent=11 // pred_check
          %p268 = pneg %p173
        $region30: #{primal_module_forward.3} parent=11 // pred_check_branch
          %270 = sbr.rel (%p268) target = $region32
        $region31: #{primal_module_forward.3} parent=11 // pred_region
          _
        $region32: #{primal_module_forward.3} parent=11 // pred_fallthru
          _
        // Predicated region
        $region33: #{primal_module_forward.3} parent=11 // pred_check
          %p271 = pneg %p194
        $region34: #{primal_module_forward.3} parent=11 // pred_check_branch
          %273 = sbr.rel (%p271) target = $region36
        $region35: #{primal_module_forward.3} parent=11 // pred_region
          _
        $region36: #{primal_module_forward.3} parent=11 // pred_fallthru
          _
        // Predicated region
        $region37: #{primal_module_forward.3} parent=11 // pred_check
          %p274 = pneg %p215
        $region38: #{primal_module_forward.3} parent=11 // pred_check_branch
          %276 = sbr.rel (%p274) target = $region40
        $region39: #{primal_module_forward.3} parent=11 // pred_region
          %s278 = ssub.s32 16, 16
          %279 = vsyncadd [#allocation4], %s278
          %s281 = sshll.u32 %s8, 4
          %s282 = int_to_ptr.vmem [resolvable:$true] %s281
          %284 = dma.vmem_to_smem %s282, 16, [#allocation3], [#allocation4]
        $region40: #{primal_module_forward.3} parent=11 // pred_fallthru
          _
      $region12: #{primal_module_forward.3} parent=5 // pred_fallthru
        _
      %p285 = scmp.lt.s32.totalorder %s16, 2
      // Predicated region
      $region41: #{primal_module_forward.3} parent=5 // pred_check
        %p286 = pneg %p285
      $region42: #{primal_module_forward.3} parent=5 // pred_check_branch
        %288 = sbr.rel (%p286) target = $region44
      $region43: #{primal_module_forward.3} parent=5 // pred_region
        // Predicated region
        $region45: #{primal_module_forward.3} parent=43 // pred_check
          %p289 = pneg %p36
        $region46: #{primal_module_forward.3} parent=43 // pred_check_branch
          %291 = sbr.rel (%p289) target = $region48
        $region47: #{primal_module_forward.3} parent=43 // pred_region
          %p292 = scmp.lt.s32.totalorder %s16, 1
          %s293 = scalar_select %p292, %s16, 1
          %s294 = smul.addr %s293, 3
          %s295 = smul.addr %s294, 4
          %s296 = scalar_lea.vmem %s0, %s295
        $region48: #{primal_module_forward.3} parent=43 // pred_fallthru
          _
        // Predicated region
        $region49: #{primal_module_forward.3} parent=43 // pred_check
          %p297 = pneg %p62
        $region50: #{primal_module_forward.3} parent=43 // pred_check_branch
          %299 = sbr.rel (%p297) target = $region52
        $region51: #{primal_module_forward.3} parent=43 // pred_region
          %p300 = scmp.lt.s32.totalorder %s16, 1
          %s301 = scalar_select %p300, %s16, 1
          %s302 = smul.addr %s301, 3
          %s303 = scalar_lea.vmem %s1, %s302
        $region52: #{primal_module_forward.3} parent=43 // pred_fallthru
          _
      $region44: #{primal_module_forward.3} parent=5 // pred_fallthru
        _
      %p304 = scmp.le.s32.totalorder 1, %s16
      %p305 = scmp.lt.s32.totalorder %s16, 3
      %p306 = pnand %p304, %p305
      %p307 = pneg %p306
      // Predicated region
      $region53: #{primal_module_forward.3} parent=5 // pred_check
        _
      $region54: #{primal_module_forward.3} parent=5 // pred_check_branch
        %309 = sbr.rel (%p306) target = $region56
      $region55: #{primal_module_forward.3} parent=5 // pred_region
        %s310 = ssub.s32 %s16, 1
        // Predicated region
        $region57: #{primal_module_forward.3} parent=55 // pred_check
          %p311 = pneg %p215
        $region58: #{primal_module_forward.3} parent=55 // pred_check_branch
          %313 = sbr.rel (%p311) target = $region60
        $region59: #{primal_module_forward.3} parent=55 // pred_region
          %314 = dma.done [#allocation4], 16
        $region60: #{primal_module_forward.3} parent=55 // pred_fallthru
          _
        %315 = sfence
        %p316 = scmp.lt.s32.totalorder %s21, 1
        %s317 = scalar_select %p316, %s21, 1
        %s318 = smul.addr %s317, 3
        %s319 = smul.addr %s318, 4
        %s320 = scalar_lea.vmem %s0, %s319
        %p321 = pneg %p42
        %p322 = pneg %p39
        %p323 = scmp.lt.s32.totalorder %s21, 1
        %s324 = scalar_select %p323, %s21, 1
        %s325 = smul.addr %s324, 3
        %s326 = scalar_lea.vmem %s1, %s325
        %p327 = pneg %p68
        %p328 = pneg %p65
        %p329 = pneg %p89
        %p330 = pneg %p86
        %p331 = pneg %p110
        %p332 = pneg %p107
        %p333 = pneg %p131
        %p334 = pneg %p128
        %p335 = pneg %p152
        %p336 = pneg %p149
        %p337 = pneg %p173
        %p338 = pneg %p170
        %p339 = pneg %p194
        %p340 = pneg %p191
        %p341 = pneg %p215
        %p342 = pneg %p212
        %p343 = pneg %p241
        %p344 = pneg %p238
        %p345 = scmp.lt.s32.totalorder %s21, 1
        %s346 = scalar_select %p345, %s21, 1
        %s347 = smul.addr %s346, 3
        %s348 = smul.addr %s347, 4
        %s349 = scalar_lea.vmem %s9, %s348
        %p350 = scmp.lt.s32.totalorder %s21, 1
        %s351 = scalar_select %p350, %s21, 1
        %s352 = smul.addr %s351, 3
        %s353 = smul.addr %s352, 4
        %s354 = scalar_lea.vmem %s0, %s353
        %p355 = scmp.lt.s32.totalorder %s21, 1
        %s356 = scalar_select %p355, %s21, 1
        %s357 = smul.addr %s356, 3
        %s358 = scalar_lea.vmem %s1, %s357
        %p359 = scmp.lt.s32.totalorder %s21, 1
        %s360 = scalar_select %p359, %s21, 1
        %s361 = smul.addr %s360, 3
        %s362 = smul.addr %s361, 4
        %s363 = scalar_lea.vmem %s9, %s362
        %vm364 = vcmask 154624
        %365 = vst.msk [vmem:[#allocation2] sm:$0xff] %vm364, 0.0
        %366 = vst.msk [vmem:[#allocation2 + $0x18] sm:$0xff] %vm364, 0.0
        %367 = vst.msk [vmem:[#allocation2 + $0x30] sm:$0xff] %vm364, 0.0
        %368 = vst.msk [vmem:[#allocation2 + $0x48] sm:$0xff] %vm364, 0.0
        %vm369 = vcmask 572824
        %370 = vst.msk [vmem:[#allocation2 + $0x10] sm:$0xff] %vm369, 0.0
        %371 = vst.msk [vmem:[#allocation2 + $0x28] sm:$0xff] %vm369, 0.0
        %372 = vst.msk [vmem:[#allocation2 + $0x40] sm:$0xff] %vm369, 0.0
        %373 = vst.msk [vmem:[#allocation2 + $0x58] sm:$0xff] %vm369, 0.0
        %v374 = vlaneseq
        %v375 = vand.u32 %v374, 127
        %v376 = vadd.s32 %v375, 128
        %v377 = vadd.s32 %v375, 256
        %vm378 = vcmp.lt.s32.totalorder %v375, 0
        %v379 = vsub.s32 0, %v375
        %v380 = vsel %vm378, %v379, %v375
        %v381 = vmul.u32.u64.compose %v380, 3817748708
        %v382 = vextract.low.u32 %v381
        %v383 = vextract.high.u32 %v381
        %v384 = vshrl.u32 %v383, 4
        %v385 = vmul.u32 %v384, 18
        %v386 = vsub.s32 %v380, %v385
        %v387 = vsub.s32 0, %v386
        %v388 = vsel %vm378, %v387, %v386
        %vm389 = vcmp.lt.s32.totalorder %v376, 0
        %v390 = vsub.s32 0, %v376
        %v391 = vsel %vm389, %v390, %v376
        %v392 = vmul.u32.u64.compose %v391, 3817748708
        %v393 = vextract.low.u32 %v392
        %v394 = vextract.high.u32 %v392
        %v395 = vshrl.u32 %v394, 4
        %v396 = vmul.u32 %v395, 18
        %v397 = vsub.s32 %v391, %v396
        %v398 = vsub.s32 0, %v397
        %v399 = vsel %vm389, %v398, %v397
        %vm400 = vcmp.lt.s32.totalorder %v377, 0
        %v401 = vsub.s32 0, %v377
        %v402 = vsel %vm400, %v401, %v377
        %v403 = vmul.u32.u64.compose %v402, 3817748708
        %v404 = vextract.low.u32 %v403
        %v405 = vextract.high.u32 %v403
        %v406 = vshrl.u32 %v405, 4
        %v407 = vmul.u32 %v406, 18
        %v408 = vsub.s32 %v402, %v407
        %v409 = vsub.s32 0, %v408
        %v410 = vsel %vm400, %v409, %v408
        %vm411 = vcmp.ne.s32.totalorder %v388, 0
        %vm412 = vcmp.ne.s32.totalorder %v399, 0
        %vm413 = vcmp.ne.s32.totalorder %v410, 0
        %vm414 = vcmp.lt.s32.totalorder %v388, 0
        %vm415 = vcmp.lt.s32.totalorder %v399, 0
        %vm416 = vcmp.lt.s32.totalorder %v410, 0
        %vm417 = vmand %vm414, %vm411
        %vm418 = vmand %vm415, %vm412
        %vm419 = vmand %vm416, %vm413
        %v420 = vadd.s32 %v388, 18
        %v421 = vadd.s32 %v399, 18
        %v422 = vadd.s32 %v410, 18
        %v423 = vsel %vm417, %v420, %v388
        %v424 = vsel %vm418, %v421, %v399
        %v425 = vsel %vm419, %v422, %v410
        %vm426 = vcmp.lt.s32.totalorder %v423, 16
        %vm427 = vcmp.lt.s32.totalorder %v424, 16
        %vm428 = vcmp.lt.s32.totalorder %v425, 16
        %v429 = vld [vmem:[%s354] sm:$0xff]
        %v430 = vld [vmem:[%s354 + $0x8] sm:$0xf]
        %v433 = vcombine.high %v429, %v429
        %434 = vrot.lane.b32.xlu0 %v429, 19
        %v435 = vpop.permute.xlu0 %434
        %436 = vrot.lane.b32.xlu0 %v433, 19
        %v437 = vpop.permute.xlu0 %436
        %438 = vrot.lane.b32.xlu0 %v430, 19
        %v439 = vpop.permute.xlu0 %438
        %v440 = vsel %vm364, %v435, %v437
        %v441 = vsel %vm364, %v437, %v439
        %vm445 = vcmask 1043608
        %446 = vst.msk [vmem:[#allocation2] sm:$0xf] %vm445, %v435
        %447 = vst [vmem:[#allocation2 + $0x8] sm:$0xf] %v440
        %vm448 = vcmask 412672
        %449 = vst.msk [vmem:[#allocation2 + $0x10] sm:$0xf] %vm448, %v441
        %v450 = vld [vmem:[%s358] sm:$0x7]
        %452 = vrot.lane.b32.xlu0 %v450, 19
        %v453 = vpop.permute.xlu0 %452
        %v454 = vrot.slane %v453, 7
        %v455 = vsel %vm364, %v454, %v453
        %v457 = vlaneseq
        %vm458 = vcmp.ge.s32.totalorder %v457, 19
        %vm459 = vcmp.lt.s32.totalorder %v457, 307
        %vm460 = vmand %vm458, %vm459
        %s461 = scalar_lea.vmem [#allocation2], 4
        %462 = vst.msk [vmem:[%s461] ss:$8 sm:$0x7] %vm460, %v455
        %463 = vst.msk [vmem:[%s461] ss:$8 sm:$0x0] %vm460, %v455
        %v464 = vld [vmem:[#allocation2] sm:$0x1f]
        %v465 = vld [vmem:[#allocation2 + $0x8] sm:$0x1f]
        %v466 = vld [vmem:[#allocation2 + $0x10] sm:$0x1f]
        %v470 = vrot.slane %v464, 3
        %v471 = vrot.slane %v465, 3
        %v472 = vrot.slane %v466, 3
        %473 = vrot.lane.b32.xlu0 %v470, 127
        %v474 = vpop.permute.xlu0 %473
        %475 = vrot.lane.b32.xlu0 %v471, 127
        %v476 = vpop.permute.xlu0 %475
        %477 = vrot.lane.b32.xlu0 %v472, 127
        %v478 = vpop.permute.xlu0 %477
        %vm479 = vcmask 1039360
        %v480 = vsel %vm479, %v474, %v476
        %v481 = vsel %vm479, %v476, %v478
        %v485 = vrot.slane %v464, 6
        %v486 = vrot.slane %v465, 6
        %v487 = vrot.slane %v466, 6
        %488 = vrot.lane.b32.xlu0 %v485, 126
        %v489 = vpop.permute.xlu0 %488
        %490 = vrot.lane.b32.xlu0 %v486, 126
        %v491 = vpop.permute.xlu0 %490
        %492 = vrot.lane.b32.xlu0 %v487, 126
        %v493 = vpop.permute.xlu0 %492
        %vm494 = vcmask 1031168
        %v495 = vsel %vm494, %v489, %v491
        %v496 = vsel %vm494, %v491, %v493
        %v500 = vrot.slane %v464, 1
        %v501 = vrot.slane %v465, 1
        %v502 = vrot.slane %v466, 1
        %503 = vrot.lane.b32.xlu0 %v500, 110
        %v504 = vpop.permute.xlu0 %503
        %505 = vrot.lane.b32.xlu0 %v501, 110
        %v506 = vpop.permute.xlu0 %505
        %507 = vrot.lane.b32.xlu0 %v502, 110
        %v508 = vpop.permute.xlu0 %507
        %vm509 = vcmask 900096
        %v510 = vsel %vm509, %v504, %v506
        %v511 = vsel %vm509, %v506, %v508
        %v515 = vrot.slane %v464, 4
        %v516 = vrot.slane %v465, 4
        %v517 = vrot.slane %v466, 4
        %518 = vrot.lane.b32.xlu0 %v515, 109
        %v519 = vpop.permute.xlu0 %518
        %520 = vrot.lane.b32.xlu0 %v516, 109
        %v521 = vpop.permute.xlu0 %520
        %522 = vrot.lane.b32.xlu0 %v517, 109
        %v523 = vpop.permute.xlu0 %522
        %vm524 = vcmask 891904
        %v525 = vsel %vm524, %v519, %v521
        %v526 = vsel %vm524, %v521, %v523
        %v530 = vrot.slane %v464, 7
        %v531 = vrot.slane %v465, 7
        %v532 = vrot.slane %v466, 7
        %533 = vrot.lane.b32.xlu0 %v530, 108
        %v534 = vpop.permute.xlu0 %533
        %535 = vrot.lane.b32.xlu0 %v531, 108
        %v536 = vpop.permute.xlu0 %535
        %537 = vrot.lane.b32.xlu0 %v532, 108
        %v538 = vpop.permute.xlu0 %537
        %vm539 = vcmask 883712
        %v540 = vsel %vm539, %v534, %v536
        %v541 = vsel %vm539, %v536, %v538
        %v545 = vrot.slane %v464, 2
        %v546 = vrot.slane %v465, 2
        %v547 = vrot.slane %v466, 2
        %548 = vrot.lane.b32.xlu0 %v545, 92
        %v549 = vpop.permute.xlu0 %548
        %550 = vrot.lane.b32.xlu0 %v546, 92
        %v551 = vpop.permute.xlu0 %550
        %552 = vrot.lane.b32.xlu0 %v547, 92
        %v553 = vpop.permute.xlu0 %552
        %vm554 = vcmask 752640
        %v555 = vsel %vm554, %v549, %v551
        %v556 = vsel %vm554, %v551, %v553
        %v560 = vrot.slane %v464, 5
        %v561 = vrot.slane %v465, 5
        %v562 = vrot.slane %v466, 5
        %563 = vrot.lane.b32.xlu0 %v560, 91
        %v564 = vpop.permute.xlu0 %563
        %565 = vrot.lane.b32.xlu0 %v561, 91
        %v566 = vpop.permute.xlu0 %565
        %567 = vrot.lane.b32.xlu0 %v562, 91
        %v568 = vpop.permute.xlu0 %567
        %vm569 = vcmask 744448
        %v570 = vsel %vm569, %v564, %v566
        %v571 = vsel %vm569, %v566, %v568
        %575 = vrot.lane.b32.xlu0 %v464, 90
        %v576 = vpop.permute.xlu0 %575
        %577 = vrot.lane.b32.xlu0 %v465, 90
        %v578 = vpop.permute.xlu0 %577
        %579 = vrot.lane.b32.xlu0 %v466, 90
        %v580 = vpop.permute.xlu0 %579
        %vm581 = vcmask 736256
        %v582 = vsel %vm581, %v576, %v578
        %v583 = vsel %vm581, %v578, %v580
        %vm584 = vcmask 1044480
        %v585 = vsel %vm584, %v464, %v480
        %v586 = vsel %vm584, %v465, %v481
        %v587 = vsel %vm584, %v466, %v478
        %vm588 = vcmask 1041408
        %v589 = vsel %vm588, %v480, %v495
        %v590 = vsel %vm588, %v481, %v496
        %v591 = vsel %vm588, %v478, %v493
        %vm592 = vcmask 1046528
        %v593 = vsel %vm592, %v589, %v510
        %v594 = vsel %vm592, %v590, %v511
        %v595 = vsel %vm592, %v591, %v508
        %vm596 = vcmask 1043456
        %v597 = vsel %vm596, %v510, %v525
        %v598 = vsel %vm596, %v511, %v526
        %v599 = vsel %vm596, %v508, %v523
        %vm600 = vcmask 1040384
        %v601 = vsel %vm600, %v525, %v540
        %v602 = vsel %vm600, %v526, %v541
        %v603 = vsel %vm600, %v523, %v538
        %vm604 = vcmask 1045504
        %v605 = vsel %vm604, %v601, %v555
        %v606 = vsel %vm604, %v602, %v556
        %v607 = vsel %vm604, %v603, %v553
        %vm608 = vcmask 1042432
        %v609 = vsel %vm608, %v555, %v570
        %v610 = vsel %vm608, %v556, %v571
        %v611 = vsel %vm608, %v553, %v568
        %v612 = vld [vmem:[%s2] sm:$0xff]
        %v613 = vld [vmem:[%s2 + $0x8] sm:$0xff]
        %v614 = vld [vmem:[%s2 + $0x10] sm:$0xff]
        %v615 = vld [vmem:[%s2 + $0x18] sm:$0xff]
        %v616 = vld [vmem:[%s3] sm:$0xff]
        %v617 = vld [vmem:[%s3 + $0x8] sm:$0xff]
        %v618 = vld [vmem:[%s3 + $0x10] sm:$0xff]
        %v619 = vld [vmem:[%s3 + $0x18] sm:$0xff]
        %621 = vset.pattern.permute.xlu0 0
        %622 = vperm.xlu0 %621, %v616
        %v623 = vpop.permute.xlu0 %622
        %626 = vset.pattern.permute.xlu0 0
        %627 = vperm.xlu0 %626, %v617
        %v628 = vpop.permute.xlu0 %627
        %631 = vset.pattern.permute.xlu0 0
        %632 = vperm.xlu0 %631, %v618
        %v633 = vpop.permute.xlu0 %632
        %636 = vset.pattern.permute.xlu0 0
        %637 = vperm.xlu0 %636, %v619
        %v638 = vpop.permute.xlu0 %637
        %vm640 = vcmask 367616
        %v642 = vsel %vm640, %v612, 0
        %v645 = vsel %vm640, %v613, 0
        %v648 = vsel %vm640, %v614, 0
        %v651 = vsel %vm640, %v615, 0
        %v653 = vsel %vm584, %v582, 0
        %v655 = vsel %vm584, %v583, 0
        %v657 = vsel %vm584, %v580, 0
        %659 = vmatprep.subr.mxu0 0.0
        %660 = vmatpush1.msra.mxu0 0.0
        %661 = vmatprep.subr.mxu0 0.0
        %662 = vmatpush1.msra.mxu0 0.0
        %663 = vmatprep.subr.mxu0 0.0
        %664 = vmatpush1.msra.mxu0 0.0
        %665 = vmatprep.subr.mxu0 0.0
        %666 = vmatpush1.msra.mxu0 0.0
        %667 = vmatprep.subr.mxu0 0.0
        %668 = vmatpush1.msra.mxu0 0.0
        %669 = vmatprep.subr.mxu0 0.0
        %670 = vmatpush1.msra.mxu0 0.0
        %671 = vmatprep.subr.mxu0 0.0
        %672 = vmatpush1.msra.mxu0 0.0
        %673 = vmatprep.subr.mxu0 0.0
        %674 = vmatpush1.msra.mxu0 0.0
        %675 = vmatprep.subr.mxu0 0.0
        %676 = vmatpush1.msra.mxu0 0.0
        %677 = vmatprep.subr.mxu0 0.0
        %678 = vmatpush1.msra.mxu0 0.0
        %679 = vmatprep.subr.mxu0 %v655
        %680 = vmatpush1.msra.mxu0 %v653
        %681 = vmatprep.subr.mxu0 %v610
        %682 = vmatpush1.msra.mxu0 %v609
        %683 = vmatprep.subr.mxu0 %v606
        %684 = vmatpush1.msra.mxu0 %v605
        %685 = vmatprep.subr.mxu0 %v598
        %686 = vmatpush1.msra.mxu0 %v597
        %687 = vmatprep.subr.mxu0 %v594
        %688 = vmatpush1.msra.mxu0 %v593
        %689 = vmatprep.subr.mxu0 %v586
        %690 = vmatpush1.msra.mxu0 %v585
        %691 = vmatprep.subr.mxu0 0.0
        %692 = vmatpush2.msra.mxu0 0.0
        %693 = vmatprep.subr.mxu0 0.0
        %694 = vmatpush2.msra.mxu0 0.0
        %695 = vmatprep.subr.mxu0 0.0
        %696 = vmatpush2.msra.mxu0 0.0
        %697 = vmatprep.subr.mxu0 0.0
        %698 = vmatpush2.msra.mxu0 0.0
        %699 = vmatprep.subr.mxu0 0.0
        %700 = vmatpush2.msra.mxu0 0.0
        %701 = vmatprep.subr.mxu0 0.0
        %702 = vmatpush2.msra.mxu0 0.0
        %703 = vmatprep.subr.mxu0 0.0
        %704 = vmatpush2.msra.mxu0 0.0
        %705 = vmatprep.subr.mxu0 0.0
        %706 = vmatpush2.msra.mxu0 0.0
        %707 = vmatprep.subr.mxu0 0.0
        %708 = vmatpush2.msra.mxu0 0.0
        %709 = vmatprep.subr.mxu0 0.0
        %710 = vmatpush2.msra.mxu0 0.0
        %711 = vmatprep.subr.mxu0 0.0
        %712 = vmatpush2.msra.mxu0 0.0
        %713 = vmatprep.subr.mxu0 0.0
        %714 = vmatpush2.msra.mxu0 0.0
        %715 = vmatprep.subr.mxu0 0.0
        %716 = vmatpush2.msra.mxu0 0.0
        %717 = vmatprep.subr.mxu0 0.0
        %718 = vmatpush2.msra.mxu0 0.0
        %719 = vmatprep.subr.mxu0 0.0
        %720 = vmatpush2.msra.mxu0 0.0
        %721 = vmatprep.subr.mxu0 0.0
        %722 = vmatpush2.msra.mxu0 0.0
        %723 = vmatprep.mubr.f32.mxu0 0.0
        %724 = vmatmul.mubr.f32.gmra.mxu0 %v642
        %v725 = vpop.f32.mrf.mxu0
        %v726 = vadd.f32 %v623, %v725
        %v727 = vpop.f32.mrf.mxu0
        %v728 = vadd.f32 %v623, %v727
        %729 = vmatprep.mubr.f32.mxu0 0.0
        %730 = vmatmul.mubr.f32.gmra.mxu0 %v645
        %v731 = vpop.f32.mrf.mxu0
        %v732 = vadd.f32 %v628, %v731
        %v733 = vpop.f32.mrf.mxu0
        %v734 = vadd.f32 %v628, %v733
        %735 = vmatprep.mubr.f32.mxu0 0.0
        %736 = vmatmul.mubr.f32.gmra.mxu0 %v648
        %v737 = vpop.f32.mrf.mxu0
        %v738 = vadd.f32 %v633, %v737
        %v739 = vpop.f32.mrf.mxu0
        %v740 = vadd.f32 %v633, %v739
        %741 = vmatprep.mubr.f32.mxu0 0.0
        %742 = vmatmul.mubr.f32.gmra.mxu0 %v651
        %v743 = vpop.f32.mrf.mxu0
        %v744 = vadd.f32 %v638, %v743
        %v745 = vpop.f32.mrf.mxu0
        %v746 = vadd.f32 %v638, %v745
        %747 = vdwg.mxu0
        %748 = vmatprep.subr.mxu0 0.0
        %749 = vmatpush1.msra.mxu0 0.0
        %750 = vmatprep.subr.mxu0 0.0
        %751 = vmatpush1.msra.mxu0 0.0
        %752 = vmatprep.subr.mxu0 0.0
        %753 = vmatpush1.msra.mxu0 0.0
        %754 = vmatprep.subr.mxu0 0.0
        %755 = vmatpush1.msra.mxu0 0.0
        %756 = vmatprep.subr.mxu0 0.0
        %757 = vmatpush1.msra.mxu0 0.0
        %758 = vmatprep.subr.mxu0 0.0
        %759 = vmatpush1.msra.mxu0 0.0
        %760 = vmatprep.subr.mxu0 0.0
        %761 = vmatpush1.msra.mxu0 0.0
        %762 = vmatprep.subr.mxu0 0.0
        %763 = vmatpush1.msra.mxu0 0.0
        %764 = vmatprep.subr.mxu0 0.0
        %765 = vmatpush1.msra.mxu0 0.0
        %766 = vmatprep.subr.mxu0 0.0
        %767 = vmatpush1.msra.mxu0 0.0
        %768 = vmatprep.subr.mxu0 0.0
        %769 = vmatpush1.msra.mxu0 %v657
        %770 = vmatprep.subr.mxu0 0.0
        %771 = vmatpush1.msra.mxu0 %v611
        %772 = vmatprep.subr.mxu0 0.0
        %773 = vmatpush1.msra.mxu0 %v607
        %774 = vmatprep.subr.mxu0 0.0
        %775 = vmatpush1.msra.mxu0 %v599
        %776 = vmatprep.subr.mxu0 0.0
        %777 = vmatpush1.msra.mxu0 %v595
        %778 = vmatprep.subr.mxu0 0.0
        %779 = vmatpush1.msra.mxu0 %v587
        %780 = vmatprep.subr.mxu0 0.0
        %781 = vmatpush2.msra.mxu0 0.0
        %782 = vmatprep.subr.mxu0 0.0
        %783 = vmatpush2.msra.mxu0 0.0
        %784 = vmatprep.subr.mxu0 0.0
        %785 = vmatpush2.msra.mxu0 0.0
        %786 = vmatprep.subr.mxu0 0.0
        %787 = vmatpush2.msra.mxu0 0.0
        %788 = vmatprep.subr.mxu0 0.0
        %789 = vmatpush2.msra.mxu0 0.0
        %790 = vmatprep.subr.mxu0 0.0
        %791 = vmatpush2.msra.mxu0 0.0
        %792 = vmatprep.subr.mxu0 0.0
        %793 = vmatpush2.msra.mxu0 0.0
        %794 = vmatprep.subr.mxu0 0.0
        %795 = vmatpush2.msra.mxu0 0.0
        %796 = vmatprep.subr.mxu0 0.0
        %797 = vmatpush2.msra.mxu0 0.0
        %798 = vmatprep.subr.mxu0 0.0
        %799 = vmatpush2.msra.mxu0 0.0
        %800 = vmatprep.subr.mxu0 0.0
        %801 = vmatpush2.msra.mxu0 0.0
        %802 = vmatprep.subr.mxu0 0.0
        %803 = vmatpush2.msra.mxu0 0.0
        %804 = vmatprep.subr.mxu0 0.0
        %805 = vmatpush2.msra.mxu0 0.0
        %806 = vmatprep.subr.mxu0 0.0
        %807 = vmatpush2.msra.mxu0 0.0
        %808 = vmatprep.subr.mxu0 0.0
        %809 = vmatpush2.msra.mxu0 0.0
        %810 = vmatprep.subr.mxu0 0.0
        %811 = vmatpush2.msra.mxu0 0.0
        %812 = vmatprep.mubr.f32.mxu0 0.0
        %813 = vmatmul.mubr.f32.gmra.mxu0 %v642
        %v814 = vpop.f32.mrf.mxu0
        %v815 = vadd.f32 %v623, %v814
        %v816 = vpop.f32.mrf.mxu0
        %817 = vmatprep.mubr.f32.mxu0 0.0
        %818 = vmatmul.mubr.f32.gmra.mxu0 %v645
        %v819 = vpop.f32.mrf.mxu0
        %v820 = vadd.f32 %v628, %v819
        %v821 = vpop.f32.mrf.mxu0
        %822 = vmatprep.mubr.f32.mxu0 0.0
        %823 = vmatmul.mubr.f32.gmra.mxu0 %v648
        %v824 = vpop.f32.mrf.mxu0
        %v825 = vadd.f32 %v633, %v824
        %v826 = vpop.f32.mrf.mxu0
        %827 = vmatprep.mubr.f32.mxu0 0.0
        %828 = vmatmul.mubr.f32.gmra.mxu0 %v651
        %v829 = vpop.f32.mrf.mxu0
        %v830 = vadd.f32 %v638, %v829
        %v831 = vpop.f32.mrf.mxu0
        %832 = vdwg.mxu0
        %vm833 = vcmp.gt.f32.partialorder %v726, 0.0
        %vm834 = vcmp.gt.f32.partialorder %v728, 0.0
        %vm835 = vcmp.gt.f32.partialorder %v815, 0.0
        %vm836 = vcmp.gt.f32.partialorder %v732, 0.0
        %vm837 = vcmp.gt.f32.partialorder %v734, 0.0
        %vm838 = vcmp.gt.f32.partialorder %v820, 0.0
        %vm839 = vcmp.gt.f32.partialorder %v738, 0.0
        %vm840 = vcmp.gt.f32.partialorder %v740, 0.0
        %vm841 = vcmp.gt.f32.partialorder %v825, 0.0
        %vm842 = vcmp.gt.f32.partialorder %v744, 0.0
        %vm843 = vcmp.gt.f32.partialorder %v746, 0.0
        %vm844 = vcmp.gt.f32.partialorder %v830, 0.0
        %s845 = sld [smem:[#allocation3]]
        %v846 = vstv %s845
        %v847 = vmul.f32 %v846, %v726
        %v848 = vmul.f32 %v846, %v728
        %v849 = vmul.f32 %v846, %v815
        %v850 = vmul.f32 %v846, %v732
        %v851 = vmul.f32 %v846, %v734
        %v852 = vmul.f32 %v846, %v820
        %v853 = vmul.f32 %v846, %v738
        %v854 = vmul.f32 %v846, %v740
        %v855 = vmul.f32 %v846, %v825
        %v856 = vmul.f32 %v846, %v744
        %v857 = vmul.f32 %v846, %v746
        %v858 = vmul.f32 %v846, %v830
        %v859 = vsel %vm833, %v726, %v847
        %v860 = vsel %vm834, %v728, %v848
        %v861 = vsel %vm835, %v815, %v849
        %v862 = vsel %vm836, %v732, %v850
        %v863 = vsel %vm837, %v734, %v851
        %v864 = vsel %vm838, %v820, %v852
        %v865 = vsel %vm839, %v738, %v853
        %v866 = vsel %vm840, %v740, %v854
        %v867 = vsel %vm841, %v825, %v855
        %v868 = vsel %vm842, %v744, %v856
        %v869 = vsel %vm843, %v746, %v857
        %v870 = vsel %vm844, %v830, %v858
        %v871 = vsel %vm426, 1, 0
        %v872 = vsel %vm427, 1, 0
        %v873 = vsel %vm428, 1, 0
        %vm874 = vcmp.eq.s32.totalorder %v871, 1
        %vm875 = vcmp.eq.s32.totalorder %v872, 1
        %vm876 = vcmp.eq.s32.totalorder %v873, 1
        %v877 = vsel %vm874, %v859, 0.0
        %v878 = vsel %vm875, %v860, 0.0
        %v879 = vsel %vm876, %v861, 0.0
        %v880 = vsel %vm874, %v862, 0.0
        %v881 = vsel %vm875, %v863, 0.0
        %v882 = vsel %vm876, %v864, 0.0
        %v883 = vsel %vm874, %v865, 0.0
        %v884 = vsel %vm875, %v866, 0.0
        %v885 = vsel %vm876, %v867, 0.0
        %v886 = vsel %vm874, %v868, 0.0
        %v887 = vsel %vm875, %v869, 0.0
        %v888 = vsel %vm876, %v870, 0.0
        %901 = vrot.lane.b32.xlu0 %v877, 19
        %v902 = vpop.permute.xlu0 %901
        %903 = vrot.lane.b32.xlu0 %v878, 19
        %v904 = vpop.permute.xlu0 %903
        %905 = vrot.lane.b32.xlu0 %v879, 19
        %v906 = vpop.permute.xlu0 %905
        %907 = vrot.lane.b32.xlu0 %v880, 19
        %v908 = vpop.permute.xlu0 %907
        %909 = vrot.lane.b32.xlu0 %v881, 19
        %v910 = vpop.permute.xlu0 %909
        %911 = vrot.lane.b32.xlu0 %v882, 19
        %v912 = vpop.permute.xlu0 %911
        %913 = vrot.lane.b32.xlu0 %v883, 19
        %v914 = vpop.permute.xlu0 %913
        %915 = vrot.lane.b32.xlu0 %v884, 19
        %v916 = vpop.permute.xlu0 %915
        %917 = vrot.lane.b32.xlu0 %v885, 19
        %v918 = vpop.permute.xlu0 %917
        %919 = vrot.lane.b32.xlu0 %v886, 19
        %v920 = vpop.permute.xlu0 %919
        %921 = vrot.lane.b32.xlu0 %v887, 19
        %v922 = vpop.permute.xlu0 %921
        %923 = vrot.lane.b32.xlu0 %v888, 19
        %v924 = vpop.permute.xlu0 %923
        %v925 = vsel %vm364, %v902, %v904
        %v926 = vsel %vm364, %v904, %v906
        %v927 = vsel %vm364, %v908, %v910
        %v928 = vsel %vm364, %v910, %v912
        %v929 = vsel %vm364, %v914, %v916
        %v930 = vsel %vm364, %v916, %v918
        %v931 = vsel %vm364, %v920, %v922
        %v932 = vsel %vm364, %v922, %v924
        %vm945 = vcmask 1047704
        %946 = vst.msk [vmem:[#allocation2] sm:$0xff] %vm945, %v902
        %947 = vst [vmem:[#allocation2 + $0x8] sm:$0xff] %v925
        %vm948 = vcmask 416768
        %949 = vst.msk [vmem:[#allocation2 + $0x10] sm:$0xff] %vm948, %v926
        %950 = vst.msk [vmem:[#allocation2 + $0x18] sm:$0xff] %vm945, %v908
        %951 = vst [vmem:[#allocation2 + $0x20] sm:$0xff] %v927
        %952 = vst.msk [vmem:[#allocation2 + $0x28] sm:$0xff] %vm948, %v928
        %953 = vst.msk [vmem:[#allocation2 + $0x30] sm:$0xff] %vm945, %v914
        %954 = vst [vmem:[#allocation2 + $0x38] sm:$0xff] %v929
        %955 = vst.msk [vmem:[#allocation2 + $0x40] sm:$0xff] %vm948, %v930
        %956 = vst.msk [vmem:[#allocation2 + $0x48] sm:$0xff] %vm945, %v920
        %957 = vst [vmem:[#allocation2 + $0x50] sm:$0xff] %v931
        %958 = vst.msk [vmem:[#allocation2 + $0x58] sm:$0xff] %vm948, %v932
        %v959 = vld [vmem:[#allocation2] sm:$0xff]
        %v960 = vld [vmem:[#allocation2 + $0x8] sm:$0xff]
        %v961 = vld [vmem:[#allocation2 + $0x10] sm:$0xff]
        %v962 = vld [vmem:[#allocation2 + $0x18] sm:$0xff]
        %v963 = vld [vmem:[#allocation2 + $0x20] sm:$0xff]
        %v964 = vld [vmem:[#allocation2 + $0x28] sm:$0xff]
        %v965 = vld [vmem:[#allocation2 + $0x30] sm:$0xff]
        %v966 = vld [vmem:[#allocation2 + $0x38] sm:$0xff]
        %v967 = vld [vmem:[#allocation2 + $0x40] sm:$0xff]
        %v968 = vld [vmem:[#allocation2 + $0x48] sm:$0xff]
        %v969 = vld [vmem:[#allocation2 + $0x50] sm:$0xff]
        %v970 = vld [vmem:[#allocation2 + $0x58] sm:$0xff]
        %983 = vrot.lane.b32.xlu0 %v959, 127
        %v984 = vpop.permute.xlu0 %983
        %985 = vrot.lane.b32.xlu0 %v960, 127
        %v986 = vpop.permute.xlu0 %985
        %987 = vrot.lane.b32.xlu0 %v961, 127
        %v988 = vpop.permute.xlu0 %987
        %989 = vrot.lane.b32.xlu0 %v962, 127
        %v990 = vpop.permute.xlu0 %989
        %991 = vrot.lane.b32.xlu0 %v963, 127
        %v992 = vpop.permute.xlu0 %991
        %993 = vrot.lane.b32.xlu0 %v964, 127
        %v994 = vpop.permute.xlu0 %993
        %995 = vrot.lane.b32.xlu0 %v965, 127
        %v996 = vpop.permute.xlu0 %995
        %997 = vrot.lane.b32.xlu0 %v966, 127
        %v998 = vpop.permute.xlu0 %997
        %999 = vrot.lane.b32.xlu0 %v967, 127
        %v1000 = vpop.permute.xlu0 %999
        %1001 = vrot.lane.b32.xlu0 %v968, 127
        %v1002 = vpop.permute.xlu0 %1001
        %1003 = vrot.lane.b32.xlu0 %v969, 127
        %v1004 = vpop.permute.xlu0 %1003
        %1005 = vrot.lane.b32.xlu0 %v970, 127
        %v1006 = vpop.permute.xlu0 %1005
        %v1007 = vsel %vm479, %v984, %v986
        %v1008 = vsel %vm479, %v986, %v988
        %v1009 = vsel %vm479, %v990, %v992
        %v1010 = vsel %vm479, %v992, %v994
        %v1011 = vsel %vm479, %v996, %v998
        %v1012 = vsel %vm479, %v998, %v1000
        %v1013 = vsel %vm479, %v1002, %v1004
        %v1014 = vsel %vm479, %v1004, %v1006
        %1027 = vrot.lane.b32.xlu0 %v959, 126
        %v1028 = vpop.permute.xlu0 %1027
        %1029 = vrot.lane.b32.xlu0 %v960, 126
        %v1030 = vpop.permute.xlu0 %1029
        %1031 = vrot.lane.b32.xlu0 %v961, 126
        %v1032 = vpop.permute.xlu0 %1031
        %1033 = vrot.lane.b32.xlu0 %v962, 126
        %v1034 = vpop.permute.xlu0 %1033
        %1035 = vrot.lane.b32.xlu0 %v963, 126
        %v1036 = vpop.permute.xlu0 %1035
        %1037 = vrot.lane.b32.xlu0 %v964, 126
        %v1038 = vpop.permute.xlu0 %1037
        %1039 = vrot.lane.b32.xlu0 %v965, 126
        %v1040 = vpop.permute.xlu0 %1039
        %1041 = vrot.lane.b32.xlu0 %v966, 126
        %v1042 = vpop.permute.xlu0 %1041
        %1043 = vrot.lane.b32.xlu0 %v967, 126
        %v1044 = vpop.permute.xlu0 %1043
        %1045 = vrot.lane.b32.xlu0 %v968, 126
        %v1046 = vpop.permute.xlu0 %1045
        %1047 = vrot.lane.b32.xlu0 %v969, 126
        %v1048 = vpop.permute.xlu0 %1047
        %1049 = vrot.lane.b32.xlu0 %v970, 126
        %v1050 = vpop.permute.xlu0 %1049
        %v1051 = vsel %vm494, %v1028, %v1030
        %v1052 = vsel %vm494, %v1030, %v1032
        %v1053 = vsel %vm494, %v1034, %v1036
        %v1054 = vsel %vm494, %v1036, %v1038
        %v1055 = vsel %vm494, %v1040, %v1042
        %v1056 = vsel %vm494, %v1042, %v1044
        %v1057 = vsel %vm494, %v1046, %v1048
        %v1058 = vsel %vm494, %v1048, %v1050
        %1071 = vrot.lane.b32.xlu0 %v959, 110
        %v1072 = vpop.permute.xlu0 %1071
        %1073 = vrot.lane.b32.xlu0 %v960, 110
        %v1074 = vpop.permute.xlu0 %1073
        %1075 = vrot.lane.b32.xlu0 %v961, 110
        %v1076 = vpop.permute.xlu0 %1075
        %1077 = vrot.lane.b32.xlu0 %v962, 110
        %v1078 = vpop.permute.xlu0 %1077
        %1079 = vrot.lane.b32.xlu0 %v963, 110
        %v1080 = vpop.permute.xlu0 %1079
        %1081 = vrot.lane.b32.xlu0 %v964, 110
        %v1082 = vpop.permute.xlu0 %1081
        %1083 = vrot.lane.b32.xlu0 %v965, 110
        %v1084 = vpop.permute.xlu0 %1083
        %1085 = vrot.lane.b32.xlu0 %v966, 110
        %v1086 = vpop.permute.xlu0 %1085
        %1087 = vrot.lane.b32.xlu0 %v967, 110
        %v1088 = vpop.permute.xlu0 %1087
        %1089 = vrot.lane.b32.xlu0 %v968, 110
        %v1090 = vpop.permute.xlu0 %1089
        %1091 = vrot.lane.b32.xlu0 %v969, 110
        %v1092 = vpop.permute.xlu0 %1091
        %1093 = vrot.lane.b32.xlu0 %v970, 110
        %v1094 = vpop.permute.xlu0 %1093
        %v1095 = vsel %vm509, %v1072, %v1074
        %v1096 = vsel %vm509, %v1074, %v1076
        %v1097 = vsel %vm509, %v1078, %v1080
        %v1098 = vsel %vm509, %v1080, %v1082
        %v1099 = vsel %vm509, %v1084, %v1086
        %v1100 = vsel %vm509, %v1086, %v1088
        %v1101 = vsel %vm509, %v1090, %v1092
        %v1102 = vsel %vm509, %v1092, %v1094
        %1115 = vrot.lane.b32.xlu0 %v959, 109
        %v1116 = vpop.permute.xlu0 %1115
        %1117 = vrot.lane.b32.xlu0 %v960, 109
        %v1118 = vpop.permute.xlu0 %1117
        %1119 = vrot.lane.b32.xlu0 %v961, 109
        %v1120 = vpop.permute.xlu0 %1119
        %1121 = vrot.lane.b32.xlu0 %v962, 109
        %v1122 = vpop.permute.xlu0 %1121
        %1123 = vrot.lane.b32.xlu0 %v963, 109
        %v1124 = vpop.permute.xlu0 %1123
        %1125 = vrot.lane.b32.xlu0 %v964, 109
        %v1126 = vpop.permute.xlu0 %1125
        %1127 = vrot.lane.b32.xlu0 %v965, 109
        %v1128 = vpop.permute.xlu0 %1127
        %1129 = vrot.lane.b32.xlu0 %v966, 109
        %v1130 = vpop.permute.xlu0 %1129
        %1131 = vrot.lane.b32.xlu0 %v967, 109
        %v1132 = vpop.permute.xlu0 %1131
        %1133 = vrot.lane.b32.xlu0 %v968, 109
        %v1134 = vpop.permute.xlu0 %1133
        %1135 = vrot.lane.b32.xlu0 %v969, 109
        %v1136 = vpop.permute.xlu0 %1135
        %1137 = vrot.lane.b32.xlu0 %v970, 109
        %v1138 = vpop.permute.xlu0 %1137
        %v1139 = vsel %vm524, %v1116, %v1118
        %v1140 = vsel %vm524, %v1118, %v1120
        %v1141 = vsel %vm524, %v1122, %v1124
        %v1142 = vsel %vm524, %v1124, %v1126
        %v1143 = vsel %vm524, %v1128, %v1130
        %v1144 = vsel %vm524, %v1130, %v1132
        %v1145 = vsel %vm524, %v1134, %v1136
        %v1146 = vsel %vm524, %v1136, %v1138
        %1159 = vrot.lane.b32.xlu0 %v959, 108
        %v1160 = vpop.permute.xlu0 %1159
        %1161 = vrot.lane.b32.xlu0 %v960, 108
        %v1162 = vpop.permute.xlu0 %1161
        %1163 = vrot.lane.b32.xlu0 %v961, 108
        %v1164 = vpop.permute.xlu0 %1163
        %1165 = vrot.lane.b32.xlu0 %v962, 108
        %v1166 = vpop.permute.xlu0 %1165
        %1167 = vrot.lane.b32.xlu0 %v963, 108
        %v1168 = vpop.permute.xlu0 %1167
        %1169 = vrot.lane.b32.xlu0 %v964, 108
        %v1170 = vpop.permute.xlu0 %1169
        %1171 = vrot.lane.b32.xlu0 %v965, 108
        %v1172 = vpop.permute.xlu0 %1171
        %1173 = vrot.lane.b32.xlu0 %v966, 108
        %v1174 = vpop.permute.xlu0 %1173
        %1175 = vrot.lane.b32.xlu0 %v967, 108
        %v1176 = vpop.permute.xlu0 %1175
        %1177 = vrot.lane.b32.xlu0 %v968, 108
        %v1178 = vpop.permute.xlu0 %1177
        %1179 = vrot.lane.b32.xlu0 %v969, 108
        %v1180 = vpop.permute.xlu0 %1179
        %1181 = vrot.lane.b32.xlu0 %v970, 108
        %v1182 = vpop.permute.xlu0 %1181
        %v1183 = vsel %vm539, %v1160, %v1162
        %v1184 = vsel %vm539, %v1162, %v1164
        %v1185 = vsel %vm539, %v1166, %v1168
        %v1186 = vsel %vm539, %v1168, %v1170
        %v1187 = vsel %vm539, %v1172, %v1174
        %v1188 = vsel %vm539, %v1174, %v1176
        %v1189 = vsel %vm539, %v1178, %v1180
        %v1190 = vsel %vm539, %v1180, %v1182
        %1203 = vrot.lane.b32.xlu0 %v959, 92
        %v1204 = vpop.permute.xlu0 %1203
        %1205 = vrot.lane.b32.xlu0 %v960, 92
        %v1206 = vpop.permute.xlu0 %1205
        %1207 = vrot.lane.b32.xlu0 %v961, 92
        %v1208 = vpop.permute.xlu0 %1207
        %1209 = vrot.lane.b32.xlu0 %v962, 92
        %v1210 = vpop.permute.xlu0 %1209
        %1211 = vrot.lane.b32.xlu0 %v963, 92
        %v1212 = vpop.permute.xlu0 %1211
        %1213 = vrot.lane.b32.xlu0 %v964, 92
        %v1214 = vpop.permute.xlu0 %1213
        %1215 = vrot.lane.b32.xlu0 %v965, 92
        %v1216 = vpop.permute.xlu0 %1215
        %1217 = vrot.lane.b32.xlu0 %v966, 92
        %v1218 = vpop.permute.xlu0 %1217
        %1219 = vrot.lane.b32.xlu0 %v967, 92
        %v1220 = vpop.permute.xlu0 %1219
        %1221 = vrot.lane.b32.xlu0 %v968, 92
        %v1222 = vpop.permute.xlu0 %1221
        %1223 = vrot.lane.b32.xlu0 %v969, 92
        %v1224 = vpop.permute.xlu0 %1223
        %1225 = vrot.lane.b32.xlu0 %v970, 92
        %v1226 = vpop.permute.xlu0 %1225
        %v1227 = vsel %vm554, %v1204, %v1206
        %v1228 = vsel %vm554, %v1206, %v1208
        %v1229 = vsel %vm554, %v1210, %v1212
        %v1230 = vsel %vm554, %v1212, %v1214
        %v1231 = vsel %vm554, %v1216, %v1218
        %v1232 = vsel %vm554, %v1218, %v1220
        %v1233 = vsel %vm554, %v1222, %v1224
        %v1234 = vsel %vm554, %v1224, %v1226
        %1247 = vrot.lane.b32.xlu0 %v959, 91
        %v1248 = vpop.permute.xlu0 %1247
        %1249 = vrot.lane.b32.xlu0 %v960, 91
        %v1250 = vpop.permute.xlu0 %1249
        %1251 = vrot.lane.b32.xlu0 %v961, 91
        %v1252 = vpop.permute.xlu0 %1251
        %1253 = vrot.lane.b32.xlu0 %v962, 91
        %v1254 = vpop.permute.xlu0 %1253
        %1255 = vrot.lane.b32.xlu0 %v963, 91
        %v1256 = vpop.permute.xlu0 %1255
        %1257 = vrot.lane.b32.xlu0 %v964, 91
        %v1258 = vpop.permute.xlu0 %1257
        %1259 = vrot.lane.b32.xlu0 %v965, 91
        %v1260 = vpop.permute.xlu0 %1259
        %1261 = vrot.lane.b32.xlu0 %v966, 91
        %v1262 = vpop.permute.xlu0 %1261
        %1263 = vrot.lane.b32.xlu0 %v967, 91
        %v1264 = vpop.permute.xlu0 %1263
        %1265 = vrot.lane.b32.xlu0 %v968, 91
        %v1266 = vpop.permute.xlu0 %1265
        %1267 = vrot.lane.b32.xlu0 %v969, 91
        %v1268 = vpop.permute.xlu0 %1267
        %1269 = vrot.lane.b32.xlu0 %v970, 91
        %v1270 = vpop.permute.xlu0 %1269
        %v1271 = vsel %vm569, %v1248, %v1250
        %v1272 = vsel %vm569, %v1250, %v1252
        %v1273 = vsel %vm569, %v1254, %v1256
        %v1274 = vsel %vm569, %v1256, %v1258
        %v1275 = vsel %vm569, %v1260, %v1262
        %v1276 = vsel %vm569, %v1262, %v1264
        %v1277 = vsel %vm569, %v1266, %v1268
        %v1278 = vsel %vm569, %v1268, %v1270
        %1291 = vrot.lane.b32.xlu0 %v959, 90
        %v1292 = vpop.permute.xlu0 %1291
        %1293 = vrot.lane.b32.xlu0 %v960, 90
        %v1294 = vpop.permute.xlu0 %1293
        %1295 = vrot.lane.b32.xlu0 %v961, 90
        %v1296 = vpop.permute.xlu0 %1295
        %1297 = vrot.lane.b32.xlu0 %v962, 90
        %v1298 = vpop.permute.xlu0 %1297
        %1299 = vrot.lane.b32.xlu0 %v963, 90
        %v1300 = vpop.permute.xlu0 %1299
        %1301 = vrot.lane.b32.xlu0 %v964, 90
        %v1302 = vpop.permute.xlu0 %1301
        %1303 = vrot.lane.b32.xlu0 %v965, 90
        %v1304 = vpop.permute.xlu0 %1303
        %1305 = vrot.lane.b32.xlu0 %v966, 90
        %v1306 = vpop.permute.xlu0 %1305
        %1307 = vrot.lane.b32.xlu0 %v967, 90
        %v1308 = vpop.permute.xlu0 %1307
        %1309 = vrot.lane.b32.xlu0 %v968, 90
        %v1310 = vpop.permute.xlu0 %1309
        %1311 = vrot.lane.b32.xlu0 %v969, 90
        %v1312 = vpop.permute.xlu0 %1311
        %1313 = vrot.lane.b32.xlu0 %v970, 90
        %v1314 = vpop.permute.xlu0 %1313
        %v1315 = vsel %vm581, %v1292, %v1294
        %v1316 = vsel %vm581, %v1294, %v1296
        %v1317 = vsel %vm581, %v1298, %v1300
        %v1318 = vsel %vm581, %v1300, %v1302
        %v1319 = vsel %vm581, %v1304, %v1306
        %v1320 = vsel %vm581, %v1306, %v1308
        %v1321 = vsel %vm581, %v1310, %v1312
        %v1322 = vsel %vm581, %v1312, %v1314
        %v1335 = vld [vmem:[%s4] sm:$0xff]
        %v1336 = vld [vmem:[%s4 + $0x8] sm:$0xff]
        %v1337 = vld [vmem:[%s4 + $0x10] sm:$0xff]
        %v1338 = vld [vmem:[%s4 + $0x18] sm:$0xff]
        %v1339 = vld [vmem:[%s4 + $0x20] sm:$0xff]
        %v1340 = vld [vmem:[%s4 + $0x28] sm:$0xff]
        %v1341 = vld [vmem:[%s4 + $0x30] sm:$0xff]
        %v1342 = vld [vmem:[%s4 + $0x38] sm:$0xff]
        %v1343 = vld [vmem:[%s4 + $0x40] sm:$0xff]
        %v1344 = vld [vmem:[%s4 + $0x48] sm:$0xff]
        %v1345 = vld [vmem:[%s4 + $0x50] sm:$0xff]
        %v1346 = vld [vmem:[%s4 + $0x58] sm:$0xff]
        %v1347 = vld [vmem:[%s5] sm:$0xff]
        %v1348 = vld [vmem:[%s5 + $0x8] sm:$0xff]
        %v1349 = vld [vmem:[%s5 + $0x10] sm:$0xff]
        %v1350 = vld [vmem:[%s5 + $0x18] sm:$0xff]
        %1352 = vset.pattern.permute.xlu0 0
        %1353 = vperm.xlu0 %1352, %v1347
        %v1354 = vpop.permute.xlu0 %1353
        %1357 = vset.pattern.permute.xlu0 0
        %1358 = vperm.xlu0 %1357, %v1348
        %v1359 = vpop.permute.xlu0 %1358
        %1362 = vset.pattern.permute.xlu0 0
        %1363 = vperm.xlu0 %1362, %v1349
        %v1364 = vpop.permute.xlu0 %1363
        %1367 = vset.pattern.permute.xlu0 0
        %1368 = vperm.xlu0 %1367, %v1350
        %v1369 = vpop.permute.xlu0 %1368
        %vm1371 = vcmask 261120
        %v1373 = vsel %vm1371, %v1337, 0
        %v1376 = vsel %vm1371, %v1340, 0
        %v1379 = vsel %vm1371, %v1343, 0
        %v1382 = vsel %vm1371, %v1346, 0
        %1384 = vmatprep.subr.mxu0 %v1102
        %1385 = vmatpush1.msra.mxu0 %v1101
        %1386 = vmatprep.subr.mxu0 %v1100
        %1387 = vmatpush1.msra.mxu0 %v1099
        %1388 = vmatprep.subr.mxu0 %v1098
        %1389 = vmatpush1.msra.mxu0 %v1097
        %1390 = vmatprep.subr.mxu0 %v1096
        %1391 = vmatpush1.msra.mxu0 %v1095
        %1392 = vmatprep.subr.mxu0 %v1058
        %1393 = vmatpush1.msra.mxu0 %v1057
        %1394 = vmatprep.subr.mxu0 %v1056
        %1395 = vmatpush1.msra.mxu0 %v1055
        %1396 = vmatprep.subr.mxu0 %v1054
        %1397 = vmatpush1.msra.mxu0 %v1053
        %1398 = vmatprep.subr.mxu0 %v1052
        %1399 = vmatpush1.msra.mxu0 %v1051
        %1400 = vmatprep.subr.mxu0 %v1014
        %1401 = vmatpush1.msra.mxu0 %v1013
        %1402 = vmatprep.subr.mxu0 %v1012
        %1403 = vmatpush1.msra.mxu0 %v1011
        %1404 = vmatprep.subr.mxu0 %v1010
        %1405 = vmatpush1.msra.mxu0 %v1009
        %1406 = vmatprep.subr.mxu0 %v1008
        %1407 = vmatpush1.msra.mxu0 %v1007
        %1408 = vmatprep.subr.mxu0 %v969
        %1409 = vmatpush1.msra.mxu0 %v968
        %1410 = vmatprep.subr.mxu0 %v966
        %1411 = vmatpush1.msra.mxu0 %v965
        %1412 = vmatprep.subr.mxu0 %v963
        %1413 = vmatpush1.msra.mxu0 %v962
        %1414 = vmatprep.subr.mxu0 %v960
        %1415 = vmatpush1.msra.mxu0 %v959
        %1416 = vmatprep.subr.mxu0 %v1278
        %1417 = vmatpush2.msra.mxu0 %v1277
        %1418 = vmatprep.subr.mxu0 %v1276
        %1419 = vmatpush2.msra.mxu0 %v1275
        %1420 = vmatprep.subr.mxu0 %v1274
        %1421 = vmatpush2.msra.mxu0 %v1273
        %1422 = vmatprep.subr.mxu0 %v1272
        %1423 = vmatpush2.msra.mxu0 %v1271
        %1424 = vmatprep.subr.mxu0 %v1234
        %1425 = vmatpush2.msra.mxu0 %v1233
        %1426 = vmatprep.subr.mxu0 %v1232
        %1427 = vmatpush2.msra.mxu0 %v1231
        %1428 = vmatprep.subr.mxu0 %v1230
        %1429 = vmatpush2.msra.mxu0 %v1229
        %1430 = vmatprep.subr.mxu0 %v1228
        %1431 = vmatpush2.msra.mxu0 %v1227
        %1432 = vmatprep.subr.mxu0 %v1190
        %1433 = vmatpush2.msra.mxu0 %v1189
        %1434 = vmatprep.subr.mxu0 %v1188
        %1435 = vmatpush2.msra.mxu0 %v1187
        %1436 = vmatprep.subr.mxu0 %v1186
        %1437 = vmatpush2.msra.mxu0 %v1185
        %1438 = vmatprep.subr.mxu0 %v1184
        %1439 = vmatpush2.msra.mxu0 %v1183
        %1440 = vmatprep.subr.mxu0 %v1146
        %1441 = vmatpush2.msra.mxu0 %v1145
        %1442 = vmatprep.subr.mxu0 %v1144
        %1443 = vmatpush2.msra.mxu0 %v1143
        %1444 = vmatprep.subr.mxu0 %v1142
        %1445 = vmatpush2.msra.mxu0 %v1141
        %1446 = vmatprep.subr.mxu0 %v1140
        %1447 = vmatpush2.msra.mxu0 %v1139
        %1448 = vmatprep.mubr.f32.mxu0 %v1336
        %1449 = vmatmul.mubr.f32.gmra.mxu0 %v1335
        %v1450 = vpop.f32.mrf.mxu0
        %v1451 = vadd.f32 %v1354, %v1450
        %v1452 = vpop.f32.mrf.mxu0
        %v1453 = vadd.f32 %v1354, %v1452
        %1454 = vmatprep.mubr.f32.mxu0 %v1339
        %1455 = vmatmul.mubr.f32.gmra.mxu0 %v1338
        %v1456 = vpop.f32.mrf.mxu0
        %v1457 = vadd.f32 %v1359, %v1456
        %v1458 = vpop.f32.mrf.mxu0
        %v1459 = vadd.f32 %v1359, %v1458
        %1460 = vmatprep.mubr.f32.mxu0 %v1342
        %1461 = vmatmul.mubr.f32.gmra.mxu0 %v1341
        %v1462 = vpop.f32.mrf.mxu0
        %v1463 = vadd.f32 %v1364, %v1462
        %v1464 = vpop.f32.mrf.mxu0
        %v1465 = vadd.f32 %v1364, %v1464
        %1466 = vmatprep.mubr.f32.mxu0 %v1345
        %1467 = vmatmul.mubr.f32.gmra.mxu0 %v1344
        %v1468 = vpop.f32.mrf.mxu0
        %v1469 = vadd.f32 %v1369, %v1468
        %v1470 = vpop.f32.mrf.mxu0
        %v1471 = vadd.f32 %v1369, %v1470
        %1472 = vdwg.mxu0
        %1473 = vmatprep.subr.mxu0 0.0
        %1474 = vmatpush1.msra.mxu0 0.0
        %1475 = vmatprep.subr.mxu0 0.0
        %1476 = vmatpush1.msra.mxu0 0.0
        %1477 = vmatprep.subr.mxu0 0.0
        %1478 = vmatpush1.msra.mxu0 0.0
        %1479 = vmatprep.subr.mxu0 0.0
        %1480 = vmatpush1.msra.mxu0 0.0
        %1481 = vmatprep.subr.mxu0 0.0
        %1482 = vmatpush1.msra.mxu0 0.0
        %1483 = vmatprep.subr.mxu0 0.0
        %1484 = vmatpush1.msra.mxu0 0.0
        %1485 = vmatprep.subr.mxu0 0.0
        %1486 = vmatpush1.msra.mxu0 0.0
        %1487 = vmatprep.subr.mxu0 0.0
        %1488 = vmatpush1.msra.mxu0 0.0
        %1489 = vmatprep.subr.mxu0 0.0
        %1490 = vmatpush1.msra.mxu0 0.0
        %1491 = vmatprep.subr.mxu0 0.0
        %1492 = vmatpush1.msra.mxu0 0.0
        %1493 = vmatprep.subr.mxu0 0.0
        %1494 = vmatpush1.msra.mxu0 0.0
        %1495 = vmatprep.subr.mxu0 0.0
        %1496 = vmatpush1.msra.mxu0 0.0
        %1497 = vmatprep.subr.mxu0 %v1322
        %1498 = vmatpush1.msra.mxu0 %v1321
        %1499 = vmatprep.subr.mxu0 %v1320
        %1500 = vmatpush1.msra.mxu0 %v1319
        %1501 = vmatprep.subr.mxu0 %v1318
        %1502 = vmatpush1.msra.mxu0 %v1317
        %1503 = vmatprep.subr.mxu0 %v1316
        %1504 = vmatpush1.msra.mxu0 %v1315
        %1505 = vmatprep.subr.mxu0 0.0
        %1506 = vmatpush2.msra.mxu0 0.0
        %1507 = vmatprep.subr.mxu0 0.0
        %1508 = vmatpush2.msra.mxu0 0.0
        %1509 = vmatprep.subr.mxu0 0.0
        %1510 = vmatpush2.msra.mxu0 0.0
        %1511 = vmatprep.subr.mxu0 0.0
        %1512 = vmatpush2.msra.mxu0 0.0
        %1513 = vmatprep.subr.mxu0 0.0
        %1514 = vmatpush2.msra.mxu0 0.0
        %1515 = vmatprep.subr.mxu0 0.0
        %1516 = vmatpush2.msra.mxu0 0.0
        %1517 = vmatprep.subr.mxu0 0.0
        %1518 = vmatpush2.msra.mxu0 0.0
        %1519 = vmatprep.subr.mxu0 0.0
        %1520 = vmatpush2.msra.mxu0 0.0
        %1521 = vmatprep.subr.mxu0 0.0
        %1522 = vmatpush2.msra.mxu0 0.0
        %1523 = vmatprep.subr.mxu0 0.0
        %1524 = vmatpush2.msra.mxu0 0.0
        %1525 = vmatprep.subr.mxu0 0.0
        %1526 = vmatpush2.msra.mxu0 0.0
        %1527 = vmatprep.subr.mxu0 0.0
        %1528 = vmatpush2.msra.mxu0 0.0
        %1529 = vmatprep.subr.mxu0 0.0
        %1530 = vmatpush2.msra.mxu0 0.0
        %1531 = vmatprep.subr.mxu0 0.0
        %1532 = vmatpush2.msra.mxu0 0.0
        %1533 = vmatprep.subr.mxu0 0.0
        %1534 = vmatpush2.msra.mxu0 0.0
        %1535 = vmatprep.subr.mxu0 0.0
        %1536 = vmatpush2.msra.mxu0 0.0
        %1537 = vmatprep.mubr.f32.mxu0 0.0
        %1538 = vmatmul.mubr.f32.gmra.mxu0 %v1373
        %v1539 = vpop.f32.mrf.mxu0
        %v1540 = vadd.f32 %v1451, %v1539
        %v1541 = vpop.f32.mrf.mxu0
        %v1542 = vadd.f32 %v1453, %v1541
        %1543 = vmatprep.mubr.f32.mxu0 0.0
        %1544 = vmatmul.mubr.f32.gmra.mxu0 %v1376
        %v1545 = vpop.f32.mrf.mxu0
        %v1546 = vadd.f32 %v1457, %v1545
        %v1547 = vpop.f32.mrf.mxu0
        %v1548 = vadd.f32 %v1459, %v1547
        %1549 = vmatprep.mubr.f32.mxu0 0.0
        %1550 = vmatmul.mubr.f32.gmra.mxu0 %v1379
        %v1551 = vpop.f32.mrf.mxu0
        %v1552 = vadd.f32 %v1463, %v1551
        %v1553 = vpop.f32.mrf.mxu0
        %v1554 = vadd.f32 %v1465, %v1553
        %1555 = vmatprep.mubr.f32.mxu0 0.0
        %1556 = vmatmul.mubr.f32.gmra.mxu0 %v1382
        %v1557 = vpop.f32.mrf.mxu0
        %v1558 = vadd.f32 %v1469, %v1557
        %v1559 = vpop.f32.mrf.mxu0
        %v1560 = vadd.f32 %v1471, %v1559
        %1561 = vdwg.mxu0
        %1562 = vmatprep.subr.mxu0 0.0
        %1563 = vmatpush1.msra.mxu0 %v1094
        %1564 = vmatprep.subr.mxu0 0.0
        %1565 = vmatpush1.msra.mxu0 %v1088
        %1566 = vmatprep.subr.mxu0 0.0
        %1567 = vmatpush1.msra.mxu0 %v1082
        %1568 = vmatprep.subr.mxu0 0.0
        %1569 = vmatpush1.msra.mxu0 %v1076
        %1570 = vmatprep.subr.mxu0 0.0
        %1571 = vmatpush1.msra.mxu0 %v1050
        %1572 = vmatprep.subr.mxu0 0.0
        %1573 = vmatpush1.msra.mxu0 %v1044
        %1574 = vmatprep.subr.mxu0 0.0
        %1575 = vmatpush1.msra.mxu0 %v1038
        %1576 = vmatprep.subr.mxu0 0.0
        %1577 = vmatpush1.msra.mxu0 %v1032
        %1578 = vmatprep.subr.mxu0 0.0
        %1579 = vmatpush1.msra.mxu0 %v1006
        %1580 = vmatprep.subr.mxu0 0.0
        %1581 = vmatpush1.msra.mxu0 %v1000
        %1582 = vmatprep.subr.mxu0 0.0
        %1583 = vmatpush1.msra.mxu0 %v994
        %1584 = vmatprep.subr.mxu0 0.0
        %1585 = vmatpush1.msra.mxu0 %v988
        %1586 = vmatprep.subr.mxu0 0.0
        %1587 = vmatpush1.msra.mxu0 %v970
        %1588 = vmatprep.subr.mxu0 0.0
        %1589 = vmatpush1.msra.mxu0 %v967
        %1590 = vmatprep.subr.mxu0 0.0
        %1591 = vmatpush1.msra.mxu0 %v964
        %1592 = vmatprep.subr.mxu0 0.0
        %1593 = vmatpush1.msra.mxu0 %v961
        %1594 = vmatprep.subr.mxu0 0.0
        %1595 = vmatpush2.msra.mxu0 %v1270
        %1596 = vmatprep.subr.mxu0 0.0
        %1597 = vmatpush2.msra.mxu0 %v1264
        %1598 = vmatprep.subr.mxu0 0.0
        %1599 = vmatpush2.msra.mxu0 %v1258
        %1600 = vmatprep.subr.mxu0 0.0
        %1601 = vmatpush2.msra.mxu0 %v1252
        %1602 = vmatprep.subr.mxu0 0.0
        %1603 = vmatpush2.msra.mxu0 %v1226
        %1604 = vmatprep.subr.mxu0 0.0
        %1605 = vmatpush2.msra.mxu0 %v1220
        %1606 = vmatprep.subr.mxu0 0.0
        %1607 = vmatpush2.msra.mxu0 %v1214
        %1608 = vmatprep.subr.mxu0 0.0
        %1609 = vmatpush2.msra.mxu0 %v1208
        %1610 = vmatprep.subr.mxu0 0.0
        %1611 = vmatpush2.msra.mxu0 %v1182
        %1612 = vmatprep.subr.mxu0 0.0
        %1613 = vmatpush2.msra.mxu0 %v1176
        %1614 = vmatprep.subr.mxu0 0.0
        %1615 = vmatpush2.msra.mxu0 %v1170
        %1616 = vmatprep.subr.mxu0 0.0
        %1617 = vmatpush2.msra.mxu0 %v1164
        %1618 = vmatprep.subr.mxu0 0.0
        %1619 = vmatpush2.msra.mxu0 %v1138
        %1620 = vmatprep.subr.mxu0 0.0
        %1621 = vmatpush2.msra.mxu0 %v1132
        %1622 = vmatprep.subr.mxu0 0.0
        %1623 = vmatpush2.msra.mxu0 %v1126
        %1624 = vmatprep.subr.mxu0 0.0
        %1625 = vmatpush2.msra.mxu0 %v1120
        %1626 = vmatprep.mubr.f32.mxu0 %v1336
        %1627 = vmatmul.mubr.f32.gmra.mxu0 %v1335
        %v1628 = vpop.f32.mrf.mxu0
        %v1629 = vadd.f32 %v1354, %v1628
        %v1630 = vpop.f32.mrf.mxu0
        %1631 = vmatprep.mubr.f32.mxu0 %v1339
        %1632 = vmatmul.mubr.f32.gmra.mxu0 %v1338
        %v1633 = vpop.f32.mrf.mxu0
        %v1634 = vadd.f32 %v1359, %v1633
        %v1635 = vpop.f32.mrf.mxu0
        %1636 = vmatprep.mubr.f32.mxu0 %v1342
        %1637 = vmatmul.mubr.f32.gmra.mxu0 %v1341
        %v1638 = vpop.f32.mrf.mxu0
        %v1639 = vadd.f32 %v1364, %v1638
        %v1640 = vpop.f32.mrf.mxu0
        %1641 = vmatprep.mubr.f32.mxu0 %v1345
        %1642 = vmatmul.mubr.f32.gmra.mxu0 %v1344
        %v1643 = vpop.f32.mrf.mxu0
        %v1644 = vadd.f32 %v1369, %v1643
        %v1645 = vpop.f32.mrf.mxu0
        %1646 = vdwg.mxu0
        %1647 = vmatprep.subr.mxu0 0.0
        %1648 = vmatpush1.msra.mxu0 0.0
        %1649 = vmatprep.subr.mxu0 0.0
        %1650 = vmatpush1.msra.mxu0 0.0
        %1651 = vmatprep.subr.mxu0 0.0
        %1652 = vmatpush1.msra.mxu0 0.0
        %1653 = vmatprep.subr.mxu0 0.0
        %1654 = vmatpush1.msra.mxu0 0.0
        %1655 = vmatprep.subr.mxu0 0.0
        %1656 = vmatpush1.msra.mxu0 0.0
        %1657 = vmatprep.subr.mxu0 0.0
        %1658 = vmatpush1.msra.mxu0 0.0
        %1659 = vmatprep.subr.mxu0 0.0
        %1660 = vmatpush1.msra.mxu0 0.0
        %1661 = vmatprep.subr.mxu0 0.0
        %1662 = vmatpush1.msra.mxu0 0.0
        %1663 = vmatprep.subr.mxu0 0.0
        %1664 = vmatpush1.msra.mxu0 0.0
        %1665 = vmatprep.subr.mxu0 0.0
        %1666 = vmatpush1.msra.mxu0 0.0
        %1667 = vmatprep.subr.mxu0 0.0
        %1668 = vmatpush1.msra.mxu0 0.0
        %1669 = vmatprep.subr.mxu0 0.0
        %1670 = vmatpush1.msra.mxu0 0.0
        %1671 = vmatprep.subr.mxu0 0.0
        %1672 = vmatpush1.msra.mxu0 %v1314
        %1673 = vmatprep.subr.mxu0 0.0
        %1674 = vmatpush1.msra.mxu0 %v1308
        %1675 = vmatprep.subr.mxu0 0.0
        %1676 = vmatpush1.msra.mxu0 %v1302
        %1677 = vmatprep.subr.mxu0 0.0
        %1678 = vmatpush1.msra.mxu0 %v1296
        %1679 = vmatprep.subr.mxu0 0.0
        %1680 = vmatpush2.msra.mxu0 0.0
        %1681 = vmatprep.subr.mxu0 0.0
        %1682 = vmatpush2.msra.mxu0 0.0
        %1683 = vmatprep.subr.mxu0 0.0
        %1684 = vmatpush2.msra.mxu0 0.0
        %1685 = vmatprep.subr.mxu0 0.0
        %1686 = vmatpush2.msra.mxu0 0.0
        %1687 = vmatprep.subr.mxu0 0.0
        %1688 = vmatpush2.msra.mxu0 0.0
        %1689 = vmatprep.subr.mxu0 0.0
        %1690 = vmatpush2.msra.mxu0 0.0
        %1691 = vmatprep.subr.mxu0 0.0
        %1692 = vmatpush2.msra.mxu0 0.0
        %1693 = vmatprep.subr.mxu0 0.0
        %1694 = vmatpush2.msra.mxu0 0.0
        %1695 = vmatprep.subr.mxu0 0.0
        %1696 = vmatpush2.msra.mxu0 0.0
        %1697 = vmatprep.subr.mxu0 0.0
        %1698 = vmatpush2.msra.mxu0 0.0
        %1699 = vmatprep.subr.mxu0 0.0
        %1700 = vmatpush2.msra.mxu0 0.0
        %1701 = vmatprep.subr.mxu0 0.0
        %1702 = vmatpush2.msra.mxu0 0.0
        %1703 = vmatprep.subr.mxu0 0.0
        %1704 = vmatpush2.msra.mxu0 0.0
        %1705 = vmatprep.subr.mxu0 0.0
        %1706 = vmatpush2.msra.mxu0 0.0
        %1707 = vmatprep.subr.mxu0 0.0
        %1708 = vmatpush2.msra.mxu0 0.0
        %1709 = vmatprep.subr.mxu0 0.0
        %1710 = vmatpush2.msra.mxu0 0.0
        %1711 = vmatprep.mubr.f32.mxu0 0.0
        %1712 = vmatmul.mubr.f32.gmra.mxu0 %v1373
        %v1713 = vpop.f32.mrf.mxu0
        %v1714 = vadd.f32 %v1629, %v1713
        %v1715 = vpop.f32.mrf.mxu0
        %1716 = vmatprep.mubr.f32.mxu0 0.0
        %1717 = vmatmul.mubr.f32.gmra.mxu0 %v1376
        %v1718 = vpop.f32.mrf.mxu0
        %v1719 = vadd.f32 %v1634, %v1718
        %v1720 = vpop.f32.mrf.mxu0
        %1721 = vmatprep.mubr.f32.mxu0 0.0
        %1722 = vmatmul.mubr.f32.gmra.mxu0 %v1379
        %v1723 = vpop.f32.mrf.mxu0
        %v1724 = vadd.f32 %v1639, %v1723
        %v1725 = vpop.f32.mrf.mxu0
        %1726 = vmatprep.mubr.f32.mxu0 0.0
        %1727 = vmatmul.mubr.f32.gmra.mxu0 %v1382
        %v1728 = vpop.f32.mrf.mxu0
        %v1729 = vadd.f32 %v1644, %v1728
        %v1730 = vpop.f32.mrf.mxu0
        %1731 = vdwg.mxu0
        %vm1732 = vcmp.gt.f32.partialorder %v1540, 0.0
        %vm1733 = vcmp.gt.f32.partialorder %v1542, 0.0
        %vm1734 = vcmp.gt.f32.partialorder %v1714, 0.0
        %vm1735 = vcmp.gt.f32.partialorder %v1546, 0.0
        %vm1736 = vcmp.gt.f32.partialorder %v1548, 0.0
        %vm1737 = vcmp.gt.f32.partialorder %v1719, 0.0
        %vm1738 = vcmp.gt.f32.partialorder %v1552, 0.0
        %vm1739 = vcmp.gt.f32.partialorder %v1554, 0.0
        %vm1740 = vcmp.gt.f32.partialorder %v1724, 0.0
        %vm1741 = vcmp.gt.f32.partialorder %v1558, 0.0
        %vm1742 = vcmp.gt.f32.partialorder %v1560, 0.0
        %vm1743 = vcmp.gt.f32.partialorder %v1729, 0.0
        %s1744 = sld [smem:[#allocation3 + $0x1]]
        %v1745 = vstv %s1744
        %v1746 = vmul.f32 %v1745, %v1540
        %v1747 = vmul.f32 %v1745, %v1542
        %v1748 = vmul.f32 %v1745, %v1714
        %v1749 = vmul.f32 %v1745, %v1546
        %v1750 = vmul.f32 %v1745, %v1548
        %v1751 = vmul.f32 %v1745, %v1719
        %v1752 = vmul.f32 %v1745, %v1552
        %v1753 = vmul.f32 %v1745, %v1554
        %v1754 = vmul.f32 %v1745, %v1724
        %v1755 = vmul.f32 %v1745, %v1558
        %v1756 = vmul.f32 %v1745, %v1560
        %v1757 = vmul.f32 %v1745, %v1729
        %v1758 = vsel %vm1732, %v1540, %v1746
        %v1759 = vsel %vm1733, %v1542, %v1747
        %v1760 = vsel %vm1734, %v1714, %v1748
        %v1761 = vsel %vm1735, %v1546, %v1749
        %v1762 = vsel %vm1736, %v1548, %v1750
        %v1763 = vsel %vm1737, %v1719, %v1751
        %v1764 = vsel %vm1738, %v1552, %v1752
        %v1765 = vsel %vm1739, %v1554, %v1753
        %v1766 = vsel %vm1740, %v1724, %v1754
        %v1767 = vsel %vm1741, %v1558, %v1755
        %v1768 = vsel %vm1742, %v1560, %v1756
        %v1769 = vsel %vm1743, %v1729, %v1757
        %v1770 = vsel %vm874, %v1758, 0.0
        %v1771 = vsel %vm875, %v1759, 0.0
        %v1772 = vsel %vm876, %v1760, 0.0
        %v1773 = vsel %vm874, %v1761, 0.0
        %v1774 = vsel %vm875, %v1762, 0.0
        %v1775 = vsel %vm876, %v1763, 0.0
        %v1776 = vsel %vm874, %v1764, 0.0
        %v1777 = vsel %vm875, %v1765, 0.0
        %v1778 = vsel %vm876, %v1766, 0.0
        %v1779 = vsel %vm874, %v1767, 0.0
        %v1780 = vsel %vm875, %v1768, 0.0
        %v1781 = vsel %vm876, %v1769, 0.0
        %1794 = vrot.lane.b32.xlu0 %v1770, 19
        %v1795 = vpop.permute.xlu0 %1794
        %1796 = vrot.lane.b32.xlu0 %v1771, 19
        %v1797 = vpop.permute.xlu0 %1796
        %1798 = vrot.lane.b32.xlu0 %v1772, 19
        %v1799 = vpop.permute.xlu0 %1798
        %1800 = vrot.lane.b32.xlu0 %v1773, 19
        %v1801 = vpop.permute.xlu0 %1800
        %1802 = vrot.lane.b32.xlu0 %v1774, 19
        %v1803 = vpop.permute.xlu0 %1802
        %1804 = vrot.lane.b32.xlu0 %v1775, 19
        %v1805 = vpop.permute.xlu0 %1804
        %1806 = vrot.lane.b32.xlu0 %v1776, 19
        %v1807 = vpop.permute.xlu0 %1806
        %1808 = vrot.lane.b32.xlu0 %v1777, 19
        %v1809 = vpop.permute.xlu0 %1808
        %1810 = vrot.lane.b32.xlu0 %v1778, 19
        %v1811 = vpop.permute.xlu0 %1810
        %1812 = vrot.lane.b32.xlu0 %v1779, 19
        %v1813 = vpop.permute.xlu0 %1812
        %1814 = vrot.lane.b32.xlu0 %v1780, 19
        %v1815 = vpop.permute.xlu0 %1814
        %1816 = vrot.lane.b32.xlu0 %v1781, 19
        %v1817 = vpop.permute.xlu0 %1816
        %v1818 = vsel %vm364, %v1795, %v1797
        %v1819 = vsel %vm364, %v1797, %v1799
        %v1820 = vsel %vm364, %v1801, %v1803
        %v1821 = vsel %vm364, %v1803, %v1805
        %v1822 = vsel %vm364, %v1807, %v1809
        %v1823 = vsel %vm364, %v1809, %v1811
        %v1824 = vsel %vm364, %v1813, %v1815
        %v1825 = vsel %vm364, %v1815, %v1817
        %1838 = vst.msk [vmem:[#allocation2] sm:$0xff] %vm945, %v1795
        %1839 = vst [vmem:[#allocation2 + $0x8] sm:$0xff] %v1818
        %1840 = vst.msk [vmem:[#allocation2 + $0x10] sm:$0xff] %vm948, %v1819
        %1841 = vst.msk [vmem:[#allocation2 + $0x18] sm:$0xff] %vm945, %v1801
        %1842 = vst [vmem:[#allocation2 + $0x20] sm:$0xff] %v1820
        %1843 = vst.msk [vmem:[#allocation2 + $0x28] sm:$0xff] %vm948, %v1821
        %1844 = vst.msk [vmem:[#allocation2 + $0x30] sm:$0xff] %vm945, %v1807
        %1845 = vst [vmem:[#allocation2 + $0x38] sm:$0xff] %v1822
        %1846 = vst.msk [vmem:[#allocation2 + $0x40] sm:$0xff] %vm948, %v1823
        %1847 = vst.msk [vmem:[#allocation2 + $0x48] sm:$0xff] %vm945, %v1813
        %1848 = vst [vmem:[#allocation2 + $0x50] sm:$0xff] %v1824
        %1849 = vst.msk [vmem:[#allocation2 + $0x58] sm:$0xff] %vm948, %v1825
        %v1850 = vld [vmem:[#allocation2] sm:$0xff]
        %v1851 = vld [vmem:[#allocation2 + $0x8] sm:$0xff]
        %v1852 = vld [vmem:[#allocation2 + $0x10] sm:$0xff]
        %v1853 = vld [vmem:[#allocation2 + $0x18] sm:$0xff]
        %v1854 = vld [vmem:[#allocation2 + $0x20] sm:$0xff]
        %v1855 = vld [vmem:[#allocation2 + $0x28] sm:$0xff]
        %v1856 = vld [vmem:[#allocation2 + $0x30] sm:$0xff]
        %v1857 = vld [vmem:[#allocation2 + $0x38] sm:$0xff]
        %v1858 = vld [vmem:[#allocation2 + $0x40] sm:$0xff]
        %v1859 = vld [vmem:[#allocation2 + $0x48] sm:$0xff]
        %v1860 = vld [vmem:[#allocation2 + $0x50] sm:$0xff]
        %v1861 = vld [vmem:[#allocation2 + $0x58] sm:$0xff]
        %1874 = vrot.lane.b32.xlu0 %v1850, 127
        %v1875 = vpop.permute.xlu0 %1874
        %1876 = vrot.lane.b32.xlu0 %v1851, 127
        %v1877 = vpop.permute.xlu0 %1876
        %1878 = vrot.lane.b32.xlu0 %v1852, 127
        %v1879 = vpop.permute.xlu0 %1878
        %1880 = vrot.lane.b32.xlu0 %v1853, 127
        %v1881 = vpop.permute.xlu0 %1880
        %1882 = vrot.lane.b32.xlu0 %v1854, 127
        %v1883 = vpop.permute.xlu0 %1882
        %1884 = vrot.lane.b32.xlu0 %v1855, 127
        %v1885 = vpop.permute.xlu0 %1884
        %1886 = vrot.lane.b32.xlu0 %v1856, 127
        %v1887 = vpop.permute.xlu0 %1886
        %1888 = vrot.lane.b32.xlu0 %v1857, 127
        %v1889 = vpop.permute.xlu0 %1888
        %1890 = vrot.lane.b32.xlu0 %v1858, 127
        %v1891 = vpop.permute.xlu0 %1890
        %1892 = vrot.lane.b32.xlu0 %v1859, 127
        %v1893 = vpop.permute.xlu0 %1892
        %1894 = vrot.lane.b32.xlu0 %v1860, 127
        %v1895 = vpop.permute.xlu0 %1894
        %1896 = vrot.lane.b32.xlu0 %v1861, 127
        %v1897 = vpop.permute.xlu0 %1896
        %v1898 = vsel %vm479, %v1875, %v1877
        %v1899 = vsel %vm479, %v1877, %v1879
        %v1900 = vsel %vm479, %v1881, %v1883
        %v1901 = vsel %vm479, %v1883, %v1885
        %v1902 = vsel %vm479, %v1887, %v1889
        %v1903 = vsel %vm479, %v1889, %v1891
        %v1904 = vsel %vm479, %v1893, %v1895
        %v1905 = vsel %vm479, %v1895, %v1897
        %1918 = vrot.lane.b32.xlu0 %v1850, 126
        %v1919 = vpop.permute.xlu0 %1918
        %1920 = vrot.lane.b32.xlu0 %v1851, 126
        %v1921 = vpop.permute.xlu0 %1920
        %1922 = vrot.lane.b32.xlu0 %v1852, 126
        %v1923 = vpop.permute.xlu0 %1922
        %1924 = vrot.lane.b32.xlu0 %v1853, 126
        %v1925 = vpop.permute.xlu0 %1924
        %1926 = vrot.lane.b32.xlu0 %v1854, 126
        %v1927 = vpop.permute.xlu0 %1926
        %1928 = vrot.lane.b32.xlu0 %v1855, 126
        %v1929 = vpop.permute.xlu0 %1928
        %1930 = vrot.lane.b32.xlu0 %v1856, 126
        %v1931 = vpop.permute.xlu0 %1930
        %1932 = vrot.lane.b32.xlu0 %v1857, 126
        %v1933 = vpop.permute.xlu0 %1932
        %1934 = vrot.lane.b32.xlu0 %v1858, 126
        %v1935 = vpop.permute.xlu0 %1934
        %1936 = vrot.lane.b32.xlu0 %v1859, 126
        %v1937 = vpop.permute.xlu0 %1936
        %1938 = vrot.lane.b32.xlu0 %v1860, 126
        %v1939 = vpop.permute.xlu0 %1938
        %1940 = vrot.lane.b32.xlu0 %v1861, 126
        %v1941 = vpop.permute.xlu0 %1940
        %v1942 = vsel %vm494, %v1919, %v1921
        %v1943 = vsel %vm494, %v1921, %v1923
        %v1944 = vsel %vm494, %v1925, %v1927
        %v1945 = vsel %vm494, %v1927, %v1929
        %v1946 = vsel %vm494, %v1931, %v1933
        %v1947 = vsel %vm494, %v1933, %v1935
        %v1948 = vsel %vm494, %v1937, %v1939
        %v1949 = vsel %vm494, %v1939, %v1941
        %1962 = vrot.lane.b32.xlu0 %v1850, 110
        %v1963 = vpop.permute.xlu0 %1962
        %1964 = vrot.lane.b32.xlu0 %v1851, 110
        %v1965 = vpop.permute.xlu0 %1964
        %1966 = vrot.lane.b32.xlu0 %v1852, 110
        %v1967 = vpop.permute.xlu0 %1966
        %1968 = vrot.lane.b32.xlu0 %v1853, 110
        %v1969 = vpop.permute.xlu0 %1968
        %1970 = vrot.lane.b32.xlu0 %v1854, 110
        %v1971 = vpop.permute.xlu0 %1970
        %1972 = vrot.lane.b32.xlu0 %v1855, 110
        %v1973 = vpop.permute.xlu0 %1972
        %1974 = vrot.lane.b32.xlu0 %v1856, 110
        %v1975 = vpop.permute.xlu0 %1974
        %1976 = vrot.lane.b32.xlu0 %v1857, 110
        %v1977 = vpop.permute.xlu0 %1976
        %1978 = vrot.lane.b32.xlu0 %v1858, 110
        %v1979 = vpop.permute.xlu0 %1978
        %1980 = vrot.lane.b32.xlu0 %v1859, 110
        %v1981 = vpop.permute.xlu0 %1980
        %1982 = vrot.lane.b32.xlu0 %v1860, 110
        %v1983 = vpop.permute.xlu0 %1982
        %1984 = vrot.lane.b32.xlu0 %v1861, 110
        %v1985 = vpop.permute.xlu0 %1984
        %v1986 = vsel %vm509, %v1963, %v1965
        %v1987 = vsel %vm509, %v1965, %v1967
        %v1988 = vsel %vm509, %v1969, %v1971
        %v1989 = vsel %vm509, %v1971, %v1973
        %v1990 = vsel %vm509, %v1975, %v1977
        %v1991 = vsel %vm509, %v1977, %v1979
        %v1992 = vsel %vm509, %v1981, %v1983
        %v1993 = vsel %vm509, %v1983, %v1985
        %2006 = vrot.lane.b32.xlu0 %v1850, 109
        %v2007 = vpop.permute.xlu0 %2006
        %2008 = vrot.lane.b32.xlu0 %v1851, 109
        %v2009 = vpop.permute.xlu0 %2008
        %2010 = vrot.lane.b32.xlu0 %v1852, 109
        %v2011 = vpop.permute.xlu0 %2010
        %2012 = vrot.lane.b32.xlu0 %v1853, 109
        %v2013 = vpop.permute.xlu0 %2012
        %2014 = vrot.lane.b32.xlu0 %v1854, 109
        %v2015 = vpop.permute.xlu0 %2014
        %2016 = vrot.lane.b32.xlu0 %v1855, 109
        %v2017 = vpop.permute.xlu0 %2016
        %2018 = vrot.lane.b32.xlu0 %v1856, 109
        %v2019 = vpop.permute.xlu0 %2018
        %2020 = vrot.lane.b32.xlu0 %v1857, 109
        %v2021 = vpop.permute.xlu0 %2020
        %2022 = vrot.lane.b32.xlu0 %v1858, 109
        %v2023 = vpop.permute.xlu0 %2022
        %2024 = vrot.lane.b32.xlu0 %v1859, 109
        %v2025 = vpop.permute.xlu0 %2024
        %2026 = vrot.lane.b32.xlu0 %v1860, 109
        %v2027 = vpop.permute.xlu0 %2026
        %2028 = vrot.lane.b32.xlu0 %v1861, 109
        %v2029 = vpop.permute.xlu0 %2028
        %v2030 = vsel %vm524, %v2007, %v2009
        %v2031 = vsel %vm524, %v2009, %v2011
        %v2032 = vsel %vm524, %v2013, %v2015
        %v2033 = vsel %vm524, %v2015, %v2017
        %v2034 = vsel %vm524, %v2019, %v2021
        %v2035 = vsel %vm524, %v2021, %v2023
        %v2036 = vsel %vm524, %v2025, %v2027
        %v2037 = vsel %vm524, %v2027, %v2029
        %2050 = vrot.lane.b32.xlu0 %v1850, 108
        %v2051 = vpop.permute.xlu0 %2050
        %2052 = vrot.lane.b32.xlu0 %v1851, 108
        %v2053 = vpop.permute.xlu0 %2052
        %2054 = vrot.lane.b32.xlu0 %v1852, 108
        %v2055 = vpop.permute.xlu0 %2054
        %2056 = vrot.lane.b32.xlu0 %v1853, 108
        %v2057 = vpop.permute.xlu0 %2056
        %2058 = vrot.lane.b32.xlu0 %v1854, 108
        %v2059 = vpop.permute.xlu0 %2058
        %2060 = vrot.lane.b32.xlu0 %v1855, 108
        %v2061 = vpop.permute.xlu0 %2060
        %2062 = vrot.lane.b32.xlu0 %v1856, 108
        %v2063 = vpop.permute.xlu0 %2062
        %2064 = vrot.lane.b32.xlu0 %v1857, 108
        %v2065 = vpop.permute.xlu0 %2064
        %2066 = vrot.lane.b32.xlu0 %v1858, 108
        %v2067 = vpop.permute.xlu0 %2066
        %2068 = vrot.lane.b32.xlu0 %v1859, 108
        %v2069 = vpop.permute.xlu0 %2068
        %2070 = vrot.lane.b32.xlu0 %v1860, 108
        %v2071 = vpop.permute.xlu0 %2070
        %2072 = vrot.lane.b32.xlu0 %v1861, 108
        %v2073 = vpop.permute.xlu0 %2072
        %v2074 = vsel %vm539, %v2051, %v2053
        %v2075 = vsel %vm539, %v2053, %v2055
        %v2076 = vsel %vm539, %v2057, %v2059
        %v2077 = vsel %vm539, %v2059, %v2061
        %v2078 = vsel %vm539, %v2063, %v2065
        %v2079 = vsel %vm539, %v2065, %v2067
        %v2080 = vsel %vm539, %v2069, %v2071
        %v2081 = vsel %vm539, %v2071, %v2073
        %2094 = vrot.lane.b32.xlu0 %v1850, 92
        %v2095 = vpop.permute.xlu0 %2094
        %2096 = vrot.lane.b32.xlu0 %v1851, 92
        %v2097 = vpop.permute.xlu0 %2096
        %2098 = vrot.lane.b32.xlu0 %v1852, 92
        %v2099 = vpop.permute.xlu0 %2098
        %2100 = vrot.lane.b32.xlu0 %v1853, 92
        %v2101 = vpop.permute.xlu0 %2100
        %2102 = vrot.lane.b32.xlu0 %v1854, 92
        %v2103 = vpop.permute.xlu0 %2102
        %2104 = vrot.lane.b32.xlu0 %v1855, 92
        %v2105 = vpop.permute.xlu0 %2104
        %2106 = vrot.lane.b32.xlu0 %v1856, 92
        %v2107 = vpop.permute.xlu0 %2106
        %2108 = vrot.lane.b32.xlu0 %v1857, 92
        %v2109 = vpop.permute.xlu0 %2108
        %2110 = vrot.lane.b32.xlu0 %v1858, 92
        %v2111 = vpop.permute.xlu0 %2110
        %2112 = vrot.lane.b32.xlu0 %v1859, 92
        %v2113 = vpop.permute.xlu0 %2112
        %2114 = vrot.lane.b32.xlu0 %v1860, 92
        %v2115 = vpop.permute.xlu0 %2114
        %2116 = vrot.lane.b32.xlu0 %v1861, 92
        %v2117 = vpop.permute.xlu0 %2116
        %v2118 = vsel %vm554, %v2095, %v2097
        %v2119 = vsel %vm554, %v2097, %v2099
        %v2120 = vsel %vm554, %v2101, %v2103
        %v2121 = vsel %vm554, %v2103, %v2105
        %v2122 = vsel %vm554, %v2107, %v2109
        %v2123 = vsel %vm554, %v2109, %v2111
        %v2124 = vsel %vm554, %v2113, %v2115
        %v2125 = vsel %vm554, %v2115, %v2117
        %2138 = vrot.lane.b32.xlu0 %v1850, 91
        %v2139 = vpop.permute.xlu0 %2138
        %2140 = vrot.lane.b32.xlu0 %v1851, 91
        %v2141 = vpop.permute.xlu0 %2140
        %2142 = vrot.lane.b32.xlu0 %v1852, 91
        %v2143 = vpop.permute.xlu0 %2142
        %2144 = vrot.lane.b32.xlu0 %v1853, 91
        %v2145 = vpop.permute.xlu0 %2144
        %2146 = vrot.lane.b32.xlu0 %v1854, 91
        %v2147 = vpop.permute.xlu0 %2146
        %2148 = vrot.lane.b32.xlu0 %v1855, 91
        %v2149 = vpop.permute.xlu0 %2148
        %2150 = vrot.lane.b32.xlu0 %v1856, 91
        %v2151 = vpop.permute.xlu0 %2150
        %2152 = vrot.lane.b32.xlu0 %v1857, 91
        %v2153 = vpop.permute.xlu0 %2152
        %2154 = vrot.lane.b32.xlu0 %v1858, 91
        %v2155 = vpop.permute.xlu0 %2154
        %2156 = vrot.lane.b32.xlu0 %v1859, 91
        %v2157 = vpop.permute.xlu0 %2156
        %2158 = vrot.lane.b32.xlu0 %v1860, 91
        %v2159 = vpop.permute.xlu0 %2158
        %2160 = vrot.lane.b32.xlu0 %v1861, 91
        %v2161 = vpop.permute.xlu0 %2160
        %v2162 = vsel %vm569, %v2139, %v2141
        %v2163 = vsel %vm569, %v2141, %v2143
        %v2164 = vsel %vm569, %v2145, %v2147
        %v2165 = vsel %vm569, %v2147, %v2149
        %v2166 = vsel %vm569, %v2151, %v2153
        %v2167 = vsel %vm569, %v2153, %v2155
        %v2168 = vsel %vm569, %v2157, %v2159
        %v2169 = vsel %vm569, %v2159, %v2161
        %2182 = vrot.lane.b32.xlu0 %v1850, 90
        %v2183 = vpop.permute.xlu0 %2182
        %2184 = vrot.lane.b32.xlu0 %v1851, 90
        %v2185 = vpop.permute.xlu0 %2184
        %2186 = vrot.lane.b32.xlu0 %v1852, 90
        %v2187 = vpop.permute.xlu0 %2186
        %2188 = vrot.lane.b32.xlu0 %v1853, 90
        %v2189 = vpop.permute.xlu0 %2188
        %2190 = vrot.lane.b32.xlu0 %v1854, 90
        %v2191 = vpop.permute.xlu0 %2190
        %2192 = vrot.lane.b32.xlu0 %v1855, 90
        %v2193 = vpop.permute.xlu0 %2192
        %2194 = vrot.lane.b32.xlu0 %v1856, 90
        %v2195 = vpop.permute.xlu0 %2194
        %2196 = vrot.lane.b32.xlu0 %v1857, 90
        %v2197 = vpop.permute.xlu0 %2196
        %2198 = vrot.lane.b32.xlu0 %v1858, 90
        %v2199 = vpop.permute.xlu0 %2198
        %2200 = vrot.lane.b32.xlu0 %v1859, 90
        %v2201 = vpop.permute.xlu0 %2200
        %2202 = vrot.lane.b32.xlu0 %v1860, 90
        %v2203 = vpop.permute.xlu0 %2202
        %2204 = vrot.lane.b32.xlu0 %v1861, 90
        %v2205 = vpop.permute.xlu0 %2204
        %v2206 = vsel %vm581, %v2183, %v2185
        %v2207 = vsel %vm581, %v2185, %v2187
        %v2208 = vsel %vm581, %v2189, %v2191
        %v2209 = vsel %vm581, %v2191, %v2193
        %v2210 = vsel %vm581, %v2195, %v2197
        %v2211 = vsel %vm581, %v2197, %v2199
        %v2212 = vsel %vm581, %v2201, %v2203
        %v2213 = vsel %vm581, %v2203, %v2205
        %v2226 = vld [vmem:[%s6] sm:$0xff]
        %v2227 = vld [vmem:[%s6 + $0x8] sm:$0xf]
        %v2228 = vld [vmem:[%s7] sm:$0xf]
        %2230 = vset.pattern.permute.xlu0 0
        %2231 = vperm.xlu0 %2230, %v2228
        %v2232 = vpop.permute.xlu0 %2231
        %v2236 = vcombine.high %v2226, %v2226
        %v2238 = vsel %vm1371, %v2227, 0
        %2240 = vmatprep.subr.mxu0 %v1993
        %2241 = vmatpush1.msra.mxu0 %v1992
        %2242 = vmatprep.subr.mxu0 %v1991
        %2243 = vmatpush1.msra.mxu0 %v1990
        %2244 = vmatprep.subr.mxu0 %v1989
        %2245 = vmatpush1.msra.mxu0 %v1988
        %2246 = vmatprep.subr.mxu0 %v1987
        %2247 = vmatpush1.msra.mxu0 %v1986
        %2248 = vmatprep.subr.mxu0 %v1949
        %2249 = vmatpush1.msra.mxu0 %v1948
        %2250 = vmatprep.subr.mxu0 %v1947
        %2251 = vmatpush1.msra.mxu0 %v1946
        %2252 = vmatprep.subr.mxu0 %v1945
        %2253 = vmatpush1.msra.mxu0 %v1944
        %2254 = vmatprep.subr.mxu0 %v1943
        %2255 = vmatpush1.msra.mxu0 %v1942
        %2256 = vmatprep.subr.mxu0 %v1905
        %2257 = vmatpush1.msra.mxu0 %v1904
        %2258 = vmatprep.subr.mxu0 %v1903
        %2259 = vmatpush1.msra.mxu0 %v1902
        %2260 = vmatprep.subr.mxu0 %v1901
        %2261 = vmatpush1.msra.mxu0 %v1900
        %2262 = vmatprep.subr.mxu0 %v1899
        %2263 = vmatpush1.msra.mxu0 %v1898
        %2264 = vmatprep.subr.mxu0 %v1860
        %2265 = vmatpush1.msra.mxu0 %v1859
        %2266 = vmatprep.subr.mxu0 %v1857
        %2267 = vmatpush1.msra.mxu0 %v1856
        %2268 = vmatprep.subr.mxu0 %v1854
        %2269 = vmatpush1.msra.mxu0 %v1853
        %2270 = vmatprep.subr.mxu0 %v1851
        %2271 = vmatpush1.msra.mxu0 %v1850
        %2272 = vmatprep.subr.mxu0 %v2169
        %2273 = vmatpush2.msra.mxu0 %v2168
        %2274 = vmatprep.subr.mxu0 %v2167
        %2275 = vmatpush2.msra.mxu0 %v2166
        %2276 = vmatprep.subr.mxu0 %v2165
        %2277 = vmatpush2.msra.mxu0 %v2164
        %2278 = vmatprep.subr.mxu0 %v2163
        %2279 = vmatpush2.msra.mxu0 %v2162
        %2280 = vmatprep.subr.mxu0 %v2125
        %2281 = vmatpush2.msra.mxu0 %v2124
        %2282 = vmatprep.subr.mxu0 %v2123
        %2283 = vmatpush2.msra.mxu0 %v2122
        %2284 = vmatprep.subr.mxu0 %v2121
        %2285 = vmatpush2.msra.mxu0 %v2120
        %2286 = vmatprep.subr.mxu0 %v2119
        %2287 = vmatpush2.msra.mxu0 %v2118
        %2288 = vmatprep.subr.mxu0 %v2081
        %2289 = vmatpush2.msra.mxu0 %v2080
        %2290 = vmatprep.subr.mxu0 %v2079
        %2291 = vmatpush2.msra.mxu0 %v2078
        %2292 = vmatprep.subr.mxu0 %v2077
        %2293 = vmatpush2.msra.mxu0 %v2076
        %2294 = vmatprep.subr.mxu0 %v2075
        %2295 = vmatpush2.msra.mxu0 %v2074
        %2296 = vmatprep.subr.mxu0 %v2037
        %2297 = vmatpush2.msra.mxu0 %v2036
        %2298 = vmatprep.subr.mxu0 %v2035
        %2299 = vmatpush2.msra.mxu0 %v2034
        %2300 = vmatprep.subr.mxu0 %v2033
        %2301 = vmatpush2.msra.mxu0 %v2032
        %2302 = vmatprep.subr.mxu0 %v2031
        %2303 = vmatpush2.msra.mxu0 %v2030
        %2304 = vmatprep.mubr.f32.mxu0 %v2236
        %2305 = vmatmul.mubr.f32.gmra.mxu0 %v2226
        %v2306 = vpop.f32.mrf.mxu0
        %v2307 = vadd.f32 %v2232, %v2306
        %v2308 = vpop.f32.mrf.mxu0
        %v2309 = vadd.f32 %v2232, %v2308
        %2310 = vdwg.mxu0
        %2311 = vmatprep.subr.mxu0 0.0
        %2312 = vmatpush1.msra.mxu0 0.0
        %2313 = vmatprep.subr.mxu0 0.0
        %2314 = vmatpush1.msra.mxu0 0.0
        %2315 = vmatprep.subr.mxu0 0.0
        %2316 = vmatpush1.msra.mxu0 0.0
        %2317 = vmatprep.subr.mxu0 0.0
        %2318 = vmatpush1.msra.mxu0 0.0
        %2319 = vmatprep.subr.mxu0 0.0
        %2320 = vmatpush1.msra.mxu0 0.0
        %2321 = vmatprep.subr.mxu0 0.0
        %2322 = vmatpush1.msra.mxu0 0.0
        %2323 = vmatprep.subr.mxu0 0.0
        %2324 = vmatpush1.msra.mxu0 0.0
        %2325 = vmatprep.subr.mxu0 0.0
        %2326 = vmatpush1.msra.mxu0 0.0
        %2327 = vmatprep.subr.mxu0 0.0
        %2328 = vmatpush1.msra.mxu0 0.0
        %2329 = vmatprep.subr.mxu0 0.0
        %2330 = vmatpush1.msra.mxu0 0.0
        %2331 = vmatprep.subr.mxu0 0.0
        %2332 = vmatpush1.msra.mxu0 0.0
        %2333 = vmatprep.subr.mxu0 0.0
        %2334 = vmatpush1.msra.mxu0 0.0
        %2335 = vmatprep.subr.mxu0 %v2213
        %2336 = vmatpush1.msra.mxu0 %v2212
        %2337 = vmatprep.subr.mxu0 %v2211
        %2338 = vmatpush1.msra.mxu0 %v2210
        %2339 = vmatprep.subr.mxu0 %v2209
        %2340 = vmatpush1.msra.mxu0 %v2208
        %2341 = vmatprep.subr.mxu0 %v2207
        %2342 = vmatpush1.msra.mxu0 %v2206
        %2343 = vmatprep.subr.mxu0 0.0
        %2344 = vmatpush2.msra.mxu0 0.0
        %2345 = vmatprep.subr.mxu0 0.0
        %2346 = vmatpush2.msra.mxu0 0.0
        %2347 = vmatprep.subr.mxu0 0.0
        %2348 = vmatpush2.msra.mxu0 0.0
        %2349 = vmatprep.subr.mxu0 0.0
        %2350 = vmatpush2.msra.mxu0 0.0
        %2351 = vmatprep.subr.mxu0 0.0
        %2352 = vmatpush2.msra.mxu0 0.0
        %2353 = vmatprep.subr.mxu0 0.0
        %2354 = vmatpush2.msra.mxu0 0.0
        %2355 = vmatprep.subr.mxu0 0.0
        %2356 = vmatpush2.msra.mxu0 0.0
        %2357 = vmatprep.subr.mxu0 0.0
        %2358 = vmatpush2.msra.mxu0 0.0
        %2359 = vmatprep.subr.mxu0 0.0
        %2360 = vmatpush2.msra.mxu0 0.0
        %2361 = vmatprep.subr.mxu0 0.0
        %2362 = vmatpush2.msra.mxu0 0.0
        %2363 = vmatprep.subr.mxu0 0.0
        %2364 = vmatpush2.msra.mxu0 0.0
        %2365 = vmatprep.subr.mxu0 0.0
        %2366 = vmatpush2.msra.mxu0 0.0
        %2367 = vmatprep.subr.mxu0 0.0
        %2368 = vmatpush2.msra.mxu0 0.0
        %2369 = vmatprep.subr.mxu0 0.0
        %2370 = vmatpush2.msra.mxu0 0.0
        %2371 = vmatprep.subr.mxu0 0.0
        %2372 = vmatpush2.msra.mxu0 0.0
        %2373 = vmatprep.subr.mxu0 0.0
        %2374 = vmatpush2.msra.mxu0 0.0
        %2375 = vmatprep.mubr.f32.mxu0 0.0
        %2376 = vmatmul.mubr.f32.gmra.mxu0 %v2238
        %v2377 = vpop.f32.mrf.mxu0
        %v2378 = vadd.f32 %v2307, %v2377
        %v2379 = vpop.f32.mrf.mxu0
        %v2380 = vadd.f32 %v2309, %v2379
        %2381 = vdwg.mxu0
        %2382 = vmatprep.subr.mxu0 0.0
        %2383 = vmatpush1.msra.mxu0 %v1985
        %2384 = vmatprep.subr.mxu0 0.0
        %2385 = vmatpush1.msra.mxu0 %v1979
        %2386 = vmatprep.subr.mxu0 0.0
        %2387 = vmatpush1.msra.mxu0 %v1973
        %2388 = vmatprep.subr.mxu0 0.0
        %2389 = vmatpush1.msra.mxu0 %v1967
        %2390 = vmatprep.subr.mxu0 0.0
        %2391 = vmatpush1.msra.mxu0 %v1941
        %2392 = vmatprep.subr.mxu0 0.0
        %2393 = vmatpush1.msra.mxu0 %v1935
        %2394 = vmatprep.subr.mxu0 0.0
        %2395 = vmatpush1.msra.mxu0 %v1929
        %2396 = vmatprep.subr.mxu0 0.0
        %2397 = vmatpush1.msra.mxu0 %v1923
        %2398 = vmatprep.subr.mxu0 0.0
        %2399 = vmatpush1.msra.mxu0 %v1897
        %2400 = vmatprep.subr.mxu0 0.0
        %2401 = vmatpush1.msra.mxu0 %v1891
        %2402 = vmatprep.subr.mxu0 0.0
        %2403 = vmatpush1.msra.mxu0 %v1885
        %2404 = vmatprep.subr.mxu0 0.0
        %2405 = vmatpush1.msra.mxu0 %v1879
        %2406 = vmatprep.subr.mxu0 0.0
        %2407 = vmatpush1.msra.mxu0 %v1861
        %2408 = vmatprep.subr.mxu0 0.0
        %2409 = vmatpush1.msra.mxu0 %v1858
        %2410 = vmatprep.subr.mxu0 0.0
        %2411 = vmatpush1.msra.mxu0 %v1855
        %2412 = vmatprep.subr.mxu0 0.0
        %2413 = vmatpush1.msra.mxu0 %v1852
        %2414 = vmatprep.subr.mxu0 0.0
        %2415 = vmatpush2.msra.mxu0 %v2161
        %2416 = vmatprep.subr.mxu0 0.0
        %2417 = vmatpush2.msra.mxu0 %v2155
        %2418 = vmatprep.subr.mxu0 0.0
        %2419 = vmatpush2.msra.mxu0 %v2149
        %2420 = vmatprep.subr.mxu0 0.0
        %2421 = vmatpush2.msra.mxu0 %v2143
        %2422 = vmatprep.subr.mxu0 0.0
        %2423 = vmatpush2.msra.mxu0 %v2117
        %2424 = vmatprep.subr.mxu0 0.0
        %2425 = vmatpush2.msra.mxu0 %v2111
        %2426 = vmatprep.subr.mxu0 0.0
        %2427 = vmatpush2.msra.mxu0 %v2105
        %2428 = vmatprep.subr.mxu0 0.0
        %2429 = vmatpush2.msra.mxu0 %v2099
        %2430 = vmatprep.subr.mxu0 0.0
        %2431 = vmatpush2.msra.mxu0 %v2073
        %2432 = vmatprep.subr.mxu0 0.0
        %2433 = vmatpush2.msra.mxu0 %v2067
        %2434 = vmatprep.subr.mxu0 0.0
        %2435 = vmatpush2.msra.mxu0 %v2061
        %2436 = vmatprep.subr.mxu0 0.0
        %2437 = vmatpush2.msra.mxu0 %v2055
        %2438 = vmatprep.subr.mxu0 0.0
        %2439 = vmatpush2.msra.mxu0 %v2029
        %2440 = vmatprep.subr.mxu0 0.0
        %2441 = vmatpush2.msra.mxu0 %v2023
        %2442 = vmatprep.subr.mxu0 0.0
        %2443 = vmatpush2.msra.mxu0 %v2017
        %2444 = vmatprep.subr.mxu0 0.0
        %2445 = vmatpush2.msra.mxu0 %v2011
        %2446 = vmatprep.mubr.f32.mxu0 %v2236
        %2447 = vmatmul.mubr.f32.gmra.mxu0 %v2226
        %v2448 = vpop.f32.mrf.mxu0
        %v2449 = vadd.f32 %v2232, %v2448
        %v2450 = vpop.f32.mrf.mxu0
        %2451 = vdwg.mxu0
        %2452 = vmatprep.subr.mxu0 0.0
        %2453 = vmatpush1.msra.mxu0 0.0
        %2454 = vmatprep.subr.mxu0 0.0
        %2455 = vmatpush1.msra.mxu0 0.0
        %2456 = vmatprep.subr.mxu0 0.0
        %2457 = vmatpush1.msra.mxu0 0.0
        %2458 = vmatprep.subr.mxu0 0.0
        %2459 = vmatpush1.msra.mxu0 0.0
        %2460 = vmatprep.subr.mxu0 0.0
        %2461 = vmatpush1.msra.mxu0 0.0
        %2462 = vmatprep.subr.mxu0 0.0
        %2463 = vmatpush1.msra.mxu0 0.0
        %2464 = vmatprep.subr.mxu0 0.0
        %2465 = vmatpush1.msra.mxu0 0.0
        %2466 = vmatprep.subr.mxu0 0.0
        %2467 = vmatpush1.msra.mxu0 0.0
        %2468 = vmatprep.subr.mxu0 0.0
        %2469 = vmatpush1.msra.mxu0 0.0
        %2470 = vmatprep.subr.mxu0 0.0
        %2471 = vmatpush1.msra.mxu0 0.0
        %2472 = vmatprep.subr.mxu0 0.0
        %2473 = vmatpush1.msra.mxu0 0.0
        %2474 = vmatprep.subr.mxu0 0.0
        %2475 = vmatpush1.msra.mxu0 0.0
        %2476 = vmatprep.subr.mxu0 0.0
        %2477 = vmatpush1.msra.mxu0 %v2205
        %2478 = vmatprep.subr.mxu0 0.0
        %2479 = vmatpush1.msra.mxu0 %v2199
        %2480 = vmatprep.subr.mxu0 0.0
        %2481 = vmatpush1.msra.mxu0 %v2193
        %2482 = vmatprep.subr.mxu0 0.0
        %2483 = vmatpush1.msra.mxu0 %v2187
        %2484 = vmatprep.subr.mxu0 0.0
        %2485 = vmatpush2.msra.mxu0 0.0
        %2486 = vmatprep.subr.mxu0 0.0
        %2487 = vmatpush2.msra.mxu0 0.0
        %2488 = vmatprep.subr.mxu0 0.0
        %2489 = vmatpush2.msra.mxu0 0.0
        %2490 = vmatprep.subr.mxu0 0.0
        %2491 = vmatpush2.msra.mxu0 0.0
        %2492 = vmatprep.subr.mxu0 0.0
        %2493 = vmatpush2.msra.mxu0 0.0
        %2494 = vmatprep.subr.mxu0 0.0
        %2495 = vmatpush2.msra.mxu0 0.0
        %2496 = vmatprep.subr.mxu0 0.0
        %2497 = vmatpush2.msra.mxu0 0.0
        %2498 = vmatprep.subr.mxu0 0.0
        %2499 = vmatpush2.msra.mxu0 0.0
        %2500 = vmatprep.subr.mxu0 0.0
        %2501 = vmatpush2.msra.mxu0 0.0
        %2502 = vmatprep.subr.mxu0 0.0
        %2503 = vmatpush2.msra.mxu0 0.0
        %2504 = vmatprep.subr.mxu0 0.0
        %2505 = vmatpush2.msra.mxu0 0.0
        %2506 = vmatprep.subr.mxu0 0.0
        %2507 = vmatpush2.msra.mxu0 0.0
        %2508 = vmatprep.subr.mxu0 0.0
        %2509 = vmatpush2.msra.mxu0 0.0
        %2510 = vmatprep.subr.mxu0 0.0
        %2511 = vmatpush2.msra.mxu0 0.0
        %2512 = vmatprep.subr.mxu0 0.0
        %2513 = vmatpush2.msra.mxu0 0.0
        %2514 = vmatprep.subr.mxu0 0.0
        %2515 = vmatpush2.msra.mxu0 0.0
        %2516 = vmatprep.mubr.f32.mxu0 0.0
        %2517 = vmatmul.mubr.f32.gmra.mxu0 %v2238
        %v2518 = vpop.f32.mrf.mxu0
        %v2519 = vadd.f32 %v2449, %v2518
        %v2520 = vpop.f32.mrf.mxu0
        %2521 = vdwg.mxu0
        %v2522 = vld [vmem:[%s354] sm:$0xff]
        %v2523 = vld [vmem:[%s354 + $0x8] sm:$0xf]
        %v2526 = vcombine.low %v2378, %v2380
        %v2528 = vadd.f32 %v2522, %v2526
        %v2529 = vadd.f32 %v2523, %v2519
        %2530 = vst [vmem:[%s363] sm:$0xff] %v2528
        %vm2531 = vcmask 257024
        %2532 = vst.msk [vmem:[%s363 + $0x8] sm:$0xf] %vm2531, %v2529
        %p2533 = scmp.lt.s32.totalorder %s21, 1
        %s2534 = scalar_select %p2533, %s21, 1
        %s2535 = smul.addr %s2534, 3
        %s2536 = smul.addr %s2535, 4
        %s2537 = scalar_lea.vmem %s9, %s2536
        // Predicated region
        $region61: #{primal_module_forward.3} parent=55 // pred_check
          %p2538 = pneg %p238
        $region62: #{primal_module_forward.3} parent=55 // pred_check_branch
          %2540 = sbr.rel (%p2538) target = $region64
        $region63: #{primal_module_forward.3} parent=55 // pred_region
          _
        $region64: #{primal_module_forward.3} parent=55 // pred_fallthru
          _
      $region56: #{primal_module_forward.3} parent=5 // pred_fallthru
        _
      %p2541 = scmp.le.s32.totalorder 2, %s16
      // Predicated region
      $region65: #{primal_module_forward.3} parent=5 // pred_check
        %p2542 = pneg %p2541
      $region66: #{primal_module_forward.3} parent=5 // pred_check_branch
        %2544 = sbr.rel (%p2542) target = $region68
      $region67: #{primal_module_forward.3} parent=5 // pred_region
        %s2545 = ssub.s32 %s16, 2
        // Predicated region
        $region69: #{primal_module_forward.3} parent=67 // pred_check
          %p2546 = pneg %p244
        $region70: #{primal_module_forward.3} parent=67 // pred_check_branch
          %2548 = sbr.rel (%p2546) target = $region72
        $region71: #{primal_module_forward.3} parent=67 // pred_region
          %p2549 = scmp.lt.s32.totalorder %s22, 1
          %s2550 = scalar_select %p2549, %s22, 1
          %s2551 = smul.addr %s2550, 3
          %s2552 = smul.addr %s2551, 4
          %s2553 = scalar_lea.vmem %s9, %s2552
        $region72: #{primal_module_forward.3} parent=67 // pred_fallthru
          _
      $region68: #{primal_module_forward.3} parent=5 // pred_fallthru
        _
    $region6: #{primal_module_forward.3} parent=1 // loop_footer
      %s20 = sadd.s32 1, %s16
    $region7: #{primal_module_forward.3} parent=1 // loop_footer_branch
      %15 = sbr.rel target = $region3
    $region8: #{primal_module_forward.3} parent=1 // loop_exit
      _
    %2554 = vsyncpa [#allocation4], 1
    %s2555 = scalar_lea.sflag [#allocation4], 1
    %2556 = vsyncpa %s2555, 1

</llo_original>
